<compile_context>
chip_gen: v7x
topology: tpu7x:2x2x1
jax: 0.10.0
libtpu: 0.0.40
codegen_flags: <defaults>
</compile_context>

<pallas_src>
import math

import jax
import jax.numpy as jnp
from jax.experimental import pallas as pl
from jax.experimental.pallas import tpu as pltpu


def _triple(v):
    return tuple(v) if isinstance(v, (tuple, list)) else (v, v, v)


def _phase_taps(K, stride, dilation, r):
    """Kernel taps k whose contribution lands on output phase r, and the input
    offset `off` such that the tap reads input index q - off."""
    taps, offs = [], []
    for k in range(K):
        if (k * dilation) % stride == r:
            taps.append(k)
            offs.append((k * dilation - r) // stride)
    return taps, offs


def _blockdiag_weight(weight, kd, kh, w_taps, groups, Cig, Cog):
    """(nTw*Cin, groups*Cog) block-diagonal weight for one (kd, kh) tap.

    Row order (g, tw, ci) matches the xw column order; column order is the
    PyTorch output-channel order (g, co)."""
    nTw = len(w_taps)
    wk = jnp.stack([weight[:, :, kd, kh, kw] for kw in w_taps], axis=1)
    w4 = wk.reshape(groups, Cig, nTw, Cog).transpose(0, 2, 1, 3)
    w4 = w4.reshape(groups, nTw * Cig, Cog)
    bd = jnp.zeros((groups, nTw * Cig, groups, Cog), dtype=weight.dtype)
    idx = jnp.arange(groups)
    bd = bd.at[idx, :, idx, :].set(w4)
    return bd.reshape(groups * nTw * Cig, groups * Cog)


def _make_phase_kernel(M, Qw_pad, h_starts_per_rh, TH):
    """Kernel for one (rd, rw) phase pair; all sh H-phases unrolled.

    Per grid step (n, qd, td):
      dstart_ref: (nTd,) SMEM     start offsets of the D taps (scalar prefetch)
      xw_ref : (1, 1, Hpad*Qw_pad, nTw*Cin)  W-tap-stacked input plane (1 D slice)
      w_ref  : (nTd*TH, nTw*Cin, Cout)       resident block-diag weights
      b_ref  : (1, Cout)                     resident bias
      o_ref  : (1, 1, sh, M, Cout)
      acc_ref: (sh, M, Cout) f32, lives across the td reduction axis
    """
    def kernel(dstart_ref, xw_ref, w_ref, b_ref, o_ref, acc_ref):
        del dstart_ref  # consumed by the index maps only
        td = pl.program_id(2)

        @pl.when(td == 0)
        def _init():
            # Bias folded into the accumulator init (added exactly once).
            acc_ref[...] = jnp.broadcast_to(
                b_ref[...].astype(jnp.float32), acc_ref.shape)

        base = td * TH  # flat weight-tap index base for this D tap
        c = 0
        for rh, h_starts in enumerate(h_starts_per_rh):
            if not h_starts:
                continue  # this H phase gets only the bias init
            local = None
            for hs in h_starts:
                r0 = hs * Qw_pad  # static, multiple of 8 -> aligned slice
                patch = xw_ref[0, 0, r0:r0 + M, :]
                contrib = jnp.dot(patch, w_ref[base + c],
                                  preferred_element_type=jnp.float32)
                local = contrib if local is None else local + contrib
                c += 1
            # Single accumulator read-modify-write per (rh, step).
            acc_ref[rh] += local

        @pl.when(td == pl.num_programs(2) - 1)
        def _store():
            o_ref[...] = acc_ref[...].reshape(o_ref.shape).astype(o_ref.dtype)

    return kernel


def conv_transpose3d_pallas(x, weight, bias, stride, padding, output_padding,
                            dilation, groups, use_bf16=False):
    """x: (N, Cin, D, H, W); weight: (Cin, Cout//groups, Kd, Kh, Kw)."""
    stride = _triple(stride)
    padding = _triple(padding)
    output_padding = _triple(output_padding)
    dilation = _triple(dilation)

    N, Cin, Din, Hin, Win = x.shape
    Cog = weight.shape[1]
    Kd, Kh, Kw = weight.shape[2], weight.shape[3], weight.shape[4]
    Cout = Cog * groups
    Cig = Cin // groups
    sd, sh, sw = stride
    pd, ph, pw = padding
    opd, oph, opw = output_padding
    dd, dh, dw = dilation

    Dout = (Din - 1) * sd - 2 * pd + dd * (Kd - 1) + opd + 1
    Hout = (Hin - 1) * sh - 2 * ph + dh * (Kh - 1) + oph + 1
    Wout = (Win - 1) * sw - 2 * pw + dw * (Kw - 1) + opw + 1

    # Phase-decomposed ("extended") output: ext = q*stride + phase, cropped to
    # [pad, pad + out_extent) at the end.
    Qd = pl.cdiv(Dout + pd, sd)
    Qh = pl.cdiv(Hout + ph, sh)
    Qw = pl.cdiv(Wout + pw, sw)
    Qw_pad = ((Qw + 7) // 8) * 8  # sublane-align every H-tap row window
    M = Qh * Qw_pad

    # Edge padding of the ORIGINAL input (non-negative by construction).
    Ld = (dd * (Kd - 1)) // sd
    Lh = (dh * (Kh - 1)) // sh
    Lw = (dw * (Kw - 1)) // sw
    Rd = max(0, Qd - Din)
    Rh = max(0, Qh - Hin)
    Rw = max(0, Qw_pad - Win)

    out_dtype = x.dtype
    cdtype = jnp.bfloat16 if use_bf16 else x.dtype

    x_cl = jnp.transpose(x, (0, 2, 3, 4, 1))  # NDHWC
    xp = jnp.pad(x_cl, ((0, 0), (Ld, Rd), (Lh, Rh), (Lw, Rw), (0, 0)))
    Dpad, Hpad = xp.shape[1], xp.shape[2]

    if bias is None:
        b_row = jnp.zeros((1, Cout), jnp.float32)
    else:
        b_row = bias.astype(jnp.float32).reshape(1, Cout)

    # H-phase tap tables (independent of rd / rw, shared by every call).
    h_info = [_phase_taps(Kh, sh, dh, rh) for rh in range(sh)]
    h_starts_per_rh = tuple(tuple(Lh - o for o in offs) for _, offs in h_info)
    TH = sum(len(t) for t, _ in h_info)

    # W-tap-stacked, (H, W)-flattened input planes, one per W phase (shared by
    # every rd and all rh).  Column order = (group, tw, ci).
    xw_per_rw, wtaps_per_rw = {}, {}
    for rw in range(sw):
        w_taps, w_offs = _phase_taps(Kw, sw, dw, rw)
        wtaps_per_rw[rw] = (w_taps, w_offs)
        if not w_taps:
            continue
        cols = []
        for g in range(groups):
            for off in w_offs:
                ws_ = Lw - off
                cols.append(xp[:, :, :, ws_:ws_ + Qw_pad,
                               g * Cig:(g + 1) * Cig])
        xw = jnp.concatenate(cols, axis=-1)  # (N, Dpad, Hpad, Qw_pad, nTw*Cin)
        xw_per_rw[rw] = xw.reshape(
            N, Dpad, Hpad * Qw_pad, len(w_taps) * Cin).astype(cdtype)

    # Generation-aware VMEM cap (v5e/v6e: 128 MiB, v7x: 64 MiB).
    try:
        vmem_cap = int(pltpu.get_tpu_info().vmem_capacity_bytes)
    except Exception:
        vmem_cap = 64 * 2**20  # conservative (v7x-safe) fallback

    bias_only = jnp.broadcast_to(
        b_row.reshape(1, 1, 1, 1, 1, Cout).astype(out_dtype),
        (N, Qd, sh, Qh, Qw, Cout))

    kernel = _make_phase_kernel(M, Qw_pad, h_starts_per_rh, TH)

    phase_outs = []
    for rd in range(sd):
        d_taps, d_offs = _phase_taps(Kd, sd, dd, rd)
        for rw in range(sw):
            w_taps, w_offs = wtaps_per_rw[rw]
            if (not d_taps) or (not w_taps) or TH == 0:
                # No kernel tap contributes to these phases: bias only.
                phase_outs.append(bias_only)
                continue

            nTd, nTw = len(d_taps), len(w_taps)
            Kcf = nTw * Cin

            # Resident block-diagonal weights, flat (td, rh, th) tap index.
            # TODO(synk): for large groups*Cog switch to a per-group variant to
            #             avoid the groups-fold block-diagonal FLOP/VMEM waste.
            w_list = []
            for kd in d_taps:
                for h_taps, _ in h_info:
                    for kh in h_taps:
                        w_list.append(_blockdiag_weight(
                            weight, kd, kh, w_taps, groups, Cig, Cog))
            w_flat = jnp.stack(w_list, axis=0).astype(cdtype)  # (nTd*TH,Kcf,Cout)

            d_starts = jnp.asarray([Ld - o for o in d_offs], jnp.int32)
            xw = xw_per_rw[rw]

            itemsize = jnp.dtype(cdtype).itemsize
            in_bytes = Hpad * Qw_pad * Kcf * itemsize
            w_bytes = nTd * TH * Kcf * Cout * itemsize
            out_bytes = sh * M * Cout * jnp.dtype(out_dtype).itemsize
            acc_bytes = sh * M * Cout * 4
            need = 2 * (in_bytes + w_bytes + out_bytes + Cout * 4) + acc_bytes
            vmem_limit = int(min(max(2 * need, 16 * 2**20),
                                 int(vmem_cap * 0.85)))

            out_ph = pl.pallas_call(
                kernel,
                out_shape=jax.ShapeDtypeStruct(
                    (N, Qd, sh, M, Cout), out_dtype),
                grid_spec=pltpu.PrefetchScalarGridSpec(
                    num_scalar_prefetch=1,
                    grid=(N, Qd, nTd),
                    in_specs=[
                        # Streamed: one (Hpad*Qw_pad, nTw*Cin) plane per step;
                        # the D slice is chosen by the prefetched offset table.
                        pl.BlockSpec(
                            (1, 1, Hpad * Qw_pad, Kcf),
                            lambda n, qd, td, dtab: (n, qd + dtab[td], 0, 0)),
                        # Resident: full block-diag weight stack (DMA'd once).
                        pl.BlockSpec(
                            (nTd * TH, Kcf, Cout),
                            lambda n, qd, td, dtab: (0, 0, 0)),
                        # Resident: bias row.
                        pl.BlockSpec(
                            (1, Cout), lambda n, qd, td, dtab: (0, 0)),
                    ],
                    out_specs=pl.BlockSpec(
                        (1, 1, sh, M, Cout),
                        lambda n, qd, td, dtab: (n, qd, 0, 0, 0)),
                    scratch_shapes=[
                        pltpu.VMEM((sh, M, Cout), jnp.float32)],
                ),
                compiler_params=pltpu.CompilerParams(
                    dimension_semantics=("parallel", "parallel", "arbitrary"),
                    vmem_limit_bytes=vmem_limit),
            )(d_starts, xw, w_flat, b_row)

            y = out_ph.reshape(N, Qd, sh, Qh, Qw_pad, Cout)[:, :, :, :, :Qw, :]
            phase_outs.append(y)

    # Single re-interleave pass: (sd, sw, N, Qd, sh, Qh, Qw, C) -> NCDHW ext,
    # then crop.  (One layout transpose total; no per-phase transposes.)
    y_all = jnp.stack(phase_outs, axis=0).reshape(
        sd, sw, N, Qd, sh, Qh, Qw, Cout)
    y_all = jnp.transpose(y_all, (2, 7, 3, 0, 5, 4, 6, 1))
    y_ext = y_all.reshape(N, Cout, Qd * sd, Qh * sh, Qw * sw)
    return y_ext[:, :, pd:pd + Dout, ph:ph + Hout, pw:pw + Wout]


def ref_conv_transpose3d(x, weight, bias, stride, padding, output_padding,
                         dilation, groups):
    """Pure-JAX reference via lax.conv_general_dilated (NCDHW)."""
    stride = _triple(stride)
    padding = _triple(padding)
    output_padding = _triple(output_padding)
    dilation = _triple(dilation)
    Cin, Cog = weight.shape[0], weight.shape[1]
    K = weight.shape[2:]
    Cig = Cin // groups
    Cout = Cog * groups
    w = weight.reshape(groups, Cig, Cog, *K)
    w = jnp.transpose(w, (0, 2, 1, 3, 4, 5)).reshape(Cout, Cig, *K)
    w = w[:, :, ::-1, ::-1, ::-1]
    pads = [(dilation[i] * (K[i] - 1) - padding[i],
             dilation[i] * (K[i] - 1) - padding[i] + output_padding[i])
            for i in range(3)]
    out = jax.lax.conv_general_dilated(
        x, w, window_strides=(1, 1, 1), padding=pads,
        lhs_dilation=stride, rhs_dilation=dilation,
        dimension_numbers=('NCDHW', 'OIDHW', 'NCDHW'),
        feature_group_count=groups)
    if bias is not None:
        out = out + bias.reshape(1, Cout, 1, 1, 1)
    return out


if __name__ == "__main__":
    # Module config (kept small): ConvTranspose3d(4, 6, 3, stride=(2,1,2),
    # padding=(1,0,1), output_padding=(1,0,1), dilation=(1,1,2), groups=2)
    in_channels, out_channels, groups = 4, 6, 2
    kernel_size = (3, 3, 3)
    stride = (2, 1, 2)
    padding = (1, 0, 1)
    output_padding = (1, 0, 1)
    dilation = (1, 1, 2)
    N, D, H, W = 2, 5, 5, 5

    key = jax.random.PRNGKey(0)
    kx, kw, kb = jax.random.split(key, 3)
    x = jax.random.normal(kx, (N, in_channels, D, H, W), jnp.float32)

    # Deterministic init mirroring reset_parameters():
    # kaiming_uniform_(a=sqrt(5)) -> U(-1/sqrt(fan_in), 1/sqrt(fan_in)),
    # fan_in = weight.shape[1] * prod(kernel_size); bias uses the same bound.
    Cog = out_channels // groups
    fan_in = Cog * math.prod(kernel_size)
    bound = 1.0 / math.sqrt(fan_in)
    weight = jax.random.uniform(kw, (in_channels, Cog) + kernel_size,
                                jnp.float32, -bound, bound)
    bias = jax.random.uniform(kb, (out_channels,), jnp.float32, -bound, bound)

    fn = jax.jit(conv_transpose3d_pallas, static_argnums=(3, 4, 5, 6, 7))
    out = fn(x, weight, bias, stride, padding, output_padding, dilation,
             groups)
    out = jax.block_until_ready(out)

    ref = ref_conv_transpose3d(x, weight, bias, stride, padding,
                               output_padding, dilation, groups)
    assert out.shape == ref.shape, (out.shape, ref.shape)
    err = float(jnp.max(jnp.abs(out - ref)))
    assert jnp.allclose(out, ref, atol=1e-4, rtol=1e-4), err

    print("KERNEL_OK")
</pallas_src>

<mosaic_0001>
module attributes {stable_mosaic.version = 11 : i64} {
  func.func @kernel(%arg0: i32, %arg1: i32, %arg2: i32, %arg3: memref<2xi32, #tpu.memory_space<smem>>, %arg4: memref<1x1x72x12xf32, #tpu.memory_space<vmem>>, %arg5: memref<6x12x6xf32, #tpu.memory_space<vmem>>, %arg6: memref<1x6xf32, #tpu.memory_space<vmem>>, %arg7: memref<1x1x1x56x6xf32, #tpu.memory_space<vmem>>, %arg8: memref<1x56x6xf32, #tpu.memory_space<vmem>>) attributes {dimension_semantics = [#tpu.dimension_semantics<parallel>, #tpu.dimension_semantics<parallel>, #tpu.dimension_semantics<arbitrary>], iteration_bounds = array<i64: 2, 6, 2>, scalar_prefetch = 1 : i64, scratch_operands = 1 : i64, tpu.core_type = #tpu.core_type<tc>, window_params = [{transform_indices = @transform_0, window_bounds = array<i64: 1, 1, 72, 12>}, {pipeline_mode = #tpu.pipeline_mode<synchronous>, transform_indices = @transform_1, window_bounds = array<i64: 6, 12, 6>}, {pipeline_mode = #tpu.pipeline_mode<synchronous>, transform_indices = @transform_2, window_bounds = array<i64: 1, 6>}, {transform_indices = @transform_3, window_bounds = array<i64: 1, 1, 1, 56, 6>}]} {
    %c0_i32 = arith.constant 0 : i32
    %0 = arith.cmpi eq, %arg2, %c0_i32 : i32
    %1 = arith.extui %0 : i1 to i32
    %c0_i32_0 = arith.constant 0 : i32
    %2 = arith.cmpi ne, %1, %c0_i32_0 : i32
    scf.if %2 {
      %c0_27 = arith.constant 0 : index
      %c0_28 = arith.constant 0 : index
      %36 = vector.load %arg6[%c0_27, %c0_28] : memref<1x6xf32, #tpu.memory_space<vmem>>, vector<1x6xf32>
      %37 = vector.shape_cast %36 : vector<1x6xf32> to vector<1x1x6xf32>
      %38 = vector.broadcast %37 : vector<1x1x6xf32> to vector<1x56x6xf32>
      %c0_29 = arith.constant 0 : index
      %c0_30 = arith.constant 0 : index
      %c0_31 = arith.constant 0 : index
      %39 = vector.load %arg8[%c0_29, %c0_30, %c0_31] : memref<1x56x6xf32, #tpu.memory_space<vmem>>, vector<1x56x6xf32>
      tpu.vector_store %arg8[%c0_29, %c0_30, %c0_31], %38 {strides = array<i32>} : memref<1x56x6xf32, #tpu.memory_space<vmem>>, vector<1x56x6xf32>,
    } else {
    }
    %c3_i32 = arith.constant 3 : i32
    %3 = arith.muli %arg2, %c3_i32 : i32
    %c0 = arith.constant 0 : index
    %c0_1 = arith.constant 0 : index
    %c16 = arith.constant 16 : index
    %c0_2 = arith.constant 0 : index
    %4 = vector.load %arg4[%c0, %c0_1, %c16, %c0_2] : memref<1x1x72x12xf32, #tpu.memory_space<vmem>>, vector<1x1x56x12xf32>
    %5 = vector.shape_cast %4 : vector<1x1x56x12xf32> to vector<56x12xf32>
    %c0_i32_3 = arith.constant 0 : i32
    %6 = arith.addi %3, %c0_i32_3 : i32
    %7 = arith.index_cast %6 : i32 to index
    %c0_4 = arith.constant 0 : index
    %c0_5 = arith.constant 0 : index
    %8 = vector.load %arg5[%7, %c0_4, %c0_5] : memref<6x12x6xf32, #tpu.memory_space<vmem>>, vector<1x12x6xf32>
    %9 = vector.shape_cast %8 : vector<1x12x6xf32> to vector<12x6xf32>
    %cst = arith.constant dense<0.000000e+00> : vector<56x6xf32>
    %10 = tpu.matmul %5, %9, %cst {dimension_numbers = #tpu.dot_dimension_numbers<[1], [0], [0], [1], [0, 0, 1, 1], [], []>} : vector<56x12xf32>, vector<12x6xf32>, vector<56x6xf32> -> vector<56x6xf32>
    %c0_6 = arith.constant 0 : index
    %c0_7 = arith.constant 0 : index
    %c8 = arith.constant 8 : index
    %c0_8 = arith.constant 0 : index
    %11 = vector.load %arg4[%c0_6, %c0_7, %c8, %c0_8] : memref<1x1x72x12xf32, #tpu.memory_space<vmem>>, vector<1x1x56x12xf32>
    %12 = vector.shape_cast %11 : vector<1x1x56x12xf32> to vector<56x12xf32>
    %c1_i32 = arith.constant 1 : i32
    %13 = arith.addi %3, %c1_i32 : i32
    %14 = arith.index_cast %13 : i32 to index
    %c0_9 = arith.constant 0 : index
    %c0_10 = arith.constant 0 : index
    %15 = vector.load %arg5[%14, %c0_9, %c0_10] : memref<6x12x6xf32, #tpu.memory_space<vmem>>, vector<1x12x6xf32>
    %16 = vector.shape_cast %15 : vector<1x12x6xf32> to vector<12x6xf32>
    %cst_11 = arith.constant dense<0.000000e+00> : vector<56x6xf32>
    %17 = tpu.matmul %12, %16, %cst_11 {dimension_numbers = #tpu.dot_dimension_numbers<[1], [0], [0], [1], [0, 0, 1, 1], [], []>} : vector<56x12xf32>, vector<12x6xf32>, vector<56x6xf32> -> vector<56x6xf32>
    %18 = arith.addf %10, %17 : vector<56x6xf32>
    %c0_12 = arith.constant 0 : index
    %c0_13 = arith.constant 0 : index
    %c0_14 = arith.constant 0 : index
    %c0_15 = arith.constant 0 : index
    %19 = vector.load %arg4[%c0_12, %c0_13, %c0_14, %c0_15] : memref<1x1x72x12xf32, #tpu.memory_space<vmem>>, vector<1x1x56x12xf32>
    %20 = vector.shape_cast %19 : vector<1x1x56x12xf32> to vector<56x12xf32>
    %c2_i32 = arith.constant 2 : i32
    %21 = arith.addi %3, %c2_i32 : i32
    %22 = arith.index_cast %21 : i32 to index
    %c0_16 = arith.constant 0 : index
    %c0_17 = arith.constant 0 : index
    %23 = vector.load %arg5[%22, %c0_16, %c0_17] : memref<6x12x6xf32, #tpu.memory_space<vmem>>, vector<1x12x6xf32>
    %24 = vector.shape_cast %23 : vector<1x12x6xf32> to vector<12x6xf32>
    %cst_18 = arith.constant dense<0.000000e+00> : vector<56x6xf32>
    %25 = tpu.matmul %20, %24, %cst_18 {dimension_numbers = #tpu.dot_dimension_numbers<[1], [0], [0], [1], [0, 0, 1, 1], [], []>} : vector<56x12xf32>, vector<12x6xf32>, vector<56x6xf32> -> vector<56x6xf32>
    %26 = arith.addf %18, %25 : vector<56x6xf32>
    %c0_19 = arith.constant 0 : index
    %c0_20 = arith.constant 0 : index
    %c0_21 = arith.constant 0 : index
    %27 = vector.load %arg8[%c0_19, %c0_20, %c0_21] : memref<1x56x6xf32, #tpu.memory_space<vmem>>, vector<1x56x6xf32>
    %28 = vector.shape_cast %27 : vector<1x56x6xf32> to vector<56x6xf32>
    %29 = arith.addf %28, %26 : vector<56x6xf32>
    %c0_22 = arith.constant 0 : index
    %c0_23 = arith.constant 0 : index
    %c0_24 = arith.constant 0 : index
    %30 = vector.load %arg8[%c0_22, %c0_23, %c0_24] : memref<1x56x6xf32, #tpu.memory_space<vmem>>, vector<1x56x6xf32>
    %31 = vector.shape_cast %30 : vector<1x56x6xf32> to vector<56x6xf32>
    %32 = vector.shape_cast %29 : vector<56x6xf32> to vector<1x56x6xf32>
    tpu.vector_store %arg8[%c0_22, %c0_23, %c0_24], %32 {strides = array<i32>} : memref<1x56x6xf32, #tpu.memory_space<vmem>>, vector<1x56x6xf32>,
    %c1_i32_25 = arith.constant 1 : i32
    %33 = arith.cmpi eq, %arg2, %c1_i32_25 : i32
    %34 = arith.extui %33 : i1 to i32
    %c0_i32_26 = arith.constant 0 : i32
    %35 = arith.cmpi ne, %34, %c0_i32_26 : i32
    scf.if %35 {
      %c0_27 = arith.constant 0 : index
      %c0_28 = arith.constant 0 : index
      %c0_29 = arith.constant 0 : index
      %36 = vector.load %arg8[%c0_27, %c0_28, %c0_29] : memref<1x56x6xf32, #tpu.memory_space<vmem>>, vector<1x56x6xf32>
      %37 = vector.shape_cast %36 : vector<1x56x6xf32> to vector<1x1x1x56x6xf32>
      %c0_30 = arith.constant 0 : index
      %c0_31 = arith.constant 0 : index
      %c0_32 = arith.constant 0 : index
      %c0_33 = arith.constant 0 : index
      %c0_34 = arith.constant 0 : index
      %38 = vector.load %arg7[%c0_30, %c0_31, %c0_32, %c0_33, %c0_34] : memref<1x1x1x56x6xf32, #tpu.memory_space<vmem>>, vector<1x1x1x56x6xf32>
      tpu.vector_store %arg7[%c0_30, %c0_31, %c0_32, %c0_33, %c0_34], %37 {strides = array<i32>} : memref<1x1x1x56x6xf32, #tpu.memory_space<vmem>>, vector<1x1x1x56x6xf32>,
    } else {
    }
    return
  }
  func.func @transform_0(%arg0: i32, %arg1: i32, %arg2: i32, %arg3: memref<2xi32, #tpu.memory_space<smem>>) -> (i32, i32, i32, i32) {
    %0 = arith.index_cast %arg2 : i32 to index
    %1 = memref.load %arg3[%0] : memref<2xi32, #tpu.memory_space<smem>>
    %2 = arith.addi %arg1, %1 : i32
    %c0_i32 = arith.constant 0 : i32
    %c0_i32_0 = arith.constant 0 : i32
    %c0_i32_1 = arith.constant 0 : i32
    return %arg0, %2, %c0_i32, %c0_i32_0 : i32, i32, i32, i32
  }
  func.func @transform_1(%arg0: i32, %arg1: i32, %arg2: i32, %arg3: memref<2xi32, #tpu.memory_space<smem>>) -> (i32, i32, i32) {
    %c0_i32 = arith.constant 0 : i32
    %c0_i32_0 = arith.constant 0 : i32
    %c0_i32_1 = arith.constant 0 : i32
    %c0_i32_2 = arith.constant 0 : i32
    return %c0_i32, %c0_i32_0, %c0_i32_1 : i32, i32, i32
  }
  func.func @transform_2(%arg0: i32, %arg1: i32, %arg2: i32, %arg3: memref<2xi32, #tpu.memory_space<smem>>) -> (i32, i32) {
    %c0_i32 = arith.constant 0 : i32
    %c0_i32_0 = arith.constant 0 : i32
    %c0_i32_1 = arith.constant 0 : i32
    return %c0_i32, %c0_i32_0 : i32, i32
  }
  func.func @transform_3(%arg0: i32, %arg1: i32, %arg2: i32, %arg3: memref<2xi32, #tpu.memory_space<smem>>) -> (i32, i32, i32, i32, i32) {
    %c0_i32 = arith.constant 0 : i32
    %c0_i32_0 = arith.constant 0 : i32
    %c0_i32_1 = arith.constant 0 : i32
    %c0_i32_2 = arith.constant 0 : i32
    return %arg0, %arg1, %c0_i32, %c0_i32_0, %c0_i32_1 : i32, i32, i32, i32, i32
  }
}

module attributes {stable_mosaic.version = 11 : i64} {
  func.func @kernel(%arg0: i32, %arg1: i32, %arg2: i32, %arg3: memref<1xi32, #tpu.memory_space<smem>>, %arg4: memref<1x1x72x12xf32, #tpu.memory_space<vmem>>, %arg5: memref<3x12x6xf32, #tpu.memory_space<vmem>>, %arg6: memref<1x6xf32, #tpu.memory_space<vmem>>, %arg7: memref<1x1x1x56x6xf32, #tpu.memory_space<vmem>>, %arg8: memref<1x56x6xf32, #tpu.memory_space<vmem>>) attributes {dimension_semantics = [#tpu.dimension_semantics<parallel>, #tpu.dimension_semantics<parallel>, #tpu.dimension_semantics<arbitrary>], iteration_bounds = array<i64: 2, 6, 1>, scalar_prefetch = 1 : i64, scratch_operands = 1 : i64, tpu.core_type = #tpu.core_type<tc>, window_params = [{transform_indices = @transform_0, window_bounds = array<i64: 1, 1, 72, 12>}, {pipeline_mode = #tpu.pipeline_mode<synchronous>, transform_indices = @transform_1, window_bounds = array<i64: 3, 12, 6>}, {pipeline_mode = #tpu.pipeline_mode<synchronous>, transform_indices = @transform_2, window_bounds = array<i64: 1, 6>}, {transform_indices = @transform_3, window_bounds = array<i64: 1, 1, 1, 56, 6>}]} {
    %c0_i32 = arith.constant 0 : i32
    %0 = arith.cmpi eq, %arg2, %c0_i32 : i32
    %1 = arith.extui %0 : i1 to i32
    %c0_i32_0 = arith.constant 0 : i32
    %2 = arith.cmpi ne, %1, %c0_i32_0 : i32
    scf.if %2 {
      %c0_27 = arith.constant 0 : index
      %c0_28 = arith.constant 0 : index
      %36 = vector.load %arg6[%c0_27, %c0_28] : memref<1x6xf32, #tpu.memory_space<vmem>>, vector<1x6xf32>
      %37 = vector.shape_cast %36 : vector<1x6xf32> to vector<1x1x6xf32>
      %38 = vector.broadcast %37 : vector<1x1x6xf32> to vector<1x56x6xf32>
      %c0_29 = arith.constant 0 : index
      %c0_30 = arith.constant 0 : index
      %c0_31 = arith.constant 0 : index
      %39 = vector.load %arg8[%c0_29, %c0_30, %c0_31] : memref<1x56x6xf32, #tpu.memory_space<vmem>>, vector<1x56x6xf32>
      tpu.vector_store %arg8[%c0_29, %c0_30, %c0_31], %38 {strides = array<i32>} : memref<1x56x6xf32, #tpu.memory_space<vmem>>, vector<1x56x6xf32>,
    } else {
    }
    %c3_i32 = arith.constant 3 : i32
    %3 = arith.muli %arg2, %c3_i32 : i32
    %c0 = arith.constant 0 : index
    %c0_1 = arith.constant 0 : index
    %c16 = arith.constant 16 : index
    %c0_2 = arith.constant 0 : index
    %4 = vector.load %arg4[%c0, %c0_1, %c16, %c0_2] : memref<1x1x72x12xf32, #tpu.memory_space<vmem>>, vector<1x1x56x12xf32>
    %5 = vector.shape_cast %4 : vector<1x1x56x12xf32> to vector<56x12xf32>
    %c0_i32_3 = arith.constant 0 : i32
    %6 = arith.addi %3, %c0_i32_3 : i32
    %7 = arith.index_cast %6 : i32 to index
    %c0_4 = arith.constant 0 : index
    %c0_5 = arith.constant 0 : index
    %8 = vector.load %arg5[%7, %c0_4, %c0_5] : memref<3x12x6xf32, #tpu.memory_space<vmem>>, vector<1x12x6xf32>
    %9 = vector.shape_cast %8 : vector<1x12x6xf32> to vector<12x6xf32>
    %cst = arith.constant dense<0.000000e+00> : vector<56x6xf32>
    %10 = tpu.matmul %5, %9, %cst {dimension_numbers = #tpu.dot_dimension_numbers<[1], [0], [0], [1], [0, 0, 1, 1], [], []>} : vector<56x12xf32>, vector<12x6xf32>, vector<56x6xf32> -> vector<56x6xf32>
    %c0_6 = arith.constant 0 : index
    %c0_7 = arith.constant 0 : index
    %c8 = arith.constant 8 : index
    %c0_8 = arith.constant 0 : index
    %11 = vector.load %arg4[%c0_6, %c0_7, %c8, %c0_8] : memref<1x1x72x12xf32, #tpu.memory_space<vmem>>, vector<1x1x56x12xf32>
    %12 = vector.shape_cast %11 : vector<1x1x56x12xf32> to vector<56x12xf32>
    %c1_i32 = arith.constant 1 : i32
    %13 = arith.addi %3, %c1_i32 : i32
    %14 = arith.index_cast %13 : i32 to index
    %c0_9 = arith.constant 0 : index
    %c0_10 = arith.constant 0 : index
    %15 = vector.load %arg5[%14, %c0_9, %c0_10] : memref<3x12x6xf32, #tpu.memory_space<vmem>>, vector<1x12x6xf32>
    %16 = vector.shape_cast %15 : vector<1x12x6xf32> to vector<12x6xf32>
    %cst_11 = arith.constant dense<0.000000e+00> : vector<56x6xf32>
    %17 = tpu.matmul %12, %16, %cst_11 {dimension_numbers = #tpu.dot_dimension_numbers<[1], [0], [0], [1], [0, 0, 1, 1], [], []>} : vector<56x12xf32>, vector<12x6xf32>, vector<56x6xf32> -> vector<56x6xf32>
    %18 = arith.addf %10, %17 : vector<56x6xf32>
    %c0_12 = arith.constant 0 : index
    %c0_13 = arith.constant 0 : index
    %c0_14 = arith.constant 0 : index
    %c0_15 = arith.constant 0 : index
    %19 = vector.load %arg4[%c0_12, %c0_13, %c0_14, %c0_15] : memref<1x1x72x12xf32, #tpu.memory_space<vmem>>, vector<1x1x56x12xf32>
    %20 = vector.shape_cast %19 : vector<1x1x56x12xf32> to vector<56x12xf32>
    %c2_i32 = arith.constant 2 : i32
    %21 = arith.addi %3, %c2_i32 : i32
    %22 = arith.index_cast %21 : i32 to index
    %c0_16 = arith.constant 0 : index
    %c0_17 = arith.constant 0 : index
    %23 = vector.load %arg5[%22, %c0_16, %c0_17] : memref<3x12x6xf32, #tpu.memory_space<vmem>>, vector<1x12x6xf32>
    %24 = vector.shape_cast %23 : vector<1x12x6xf32> to vector<12x6xf32>
    %cst_18 = arith.constant dense<0.000000e+00> : vector<56x6xf32>
    %25 = tpu.matmul %20, %24, %cst_18 {dimension_numbers = #tpu.dot_dimension_numbers<[1], [0], [0], [1], [0, 0, 1, 1], [], []>} : vector<56x12xf32>, vector<12x6xf32>, vector<56x6xf32> -> vector<56x6xf32>
    %26 = arith.addf %18, %25 : vector<56x6xf32>
    %c0_19 = arith.constant 0 : index
    %c0_20 = arith.constant 0 : index
    %c0_21 = arith.constant 0 : index
    %27 = vector.load %arg8[%c0_19, %c0_20, %c0_21] : memref<1x56x6xf32, #tpu.memory_space<vmem>>, vector<1x56x6xf32>
    %28 = vector.shape_cast %27 : vector<1x56x6xf32> to vector<56x6xf32>
    %29 = arith.addf %28, %26 : vector<56x6xf32>
    %c0_22 = arith.constant 0 : index
    %c0_23 = arith.constant 0 : index
    %c0_24 = arith.constant 0 : index
    %30 = vector.load %arg8[%c0_22, %c0_23, %c0_24] : memref<1x56x6xf32, #tpu.memory_space<vmem>>, vector<1x56x6xf32>
    %31 = vector.shape_cast %30 : vector<1x56x6xf32> to vector<56x6xf32>
    %32 = vector.shape_cast %29 : vector<56x6xf32> to vector<1x56x6xf32>
    tpu.vector_store %arg8[%c0_22, %c0_23, %c0_24], %32 {strides = array<i32>} : memref<1x56x6xf32, #tpu.memory_space<vmem>>, vector<1x56x6xf32>,
    %c0_i32_25 = arith.constant 0 : i32
    %33 = arith.cmpi eq, %arg2, %c0_i32_25 : i32
    %34 = arith.extui %33 : i1 to i32
    %c0_i32_26 = arith.constant 0 : i32
    %35 = arith.cmpi ne, %34, %c0_i32_26 : i32
    scf.if %35 {
      %c0_27 = arith.constant 0 : index
      %c0_28 = arith.constant 0 : index
      %c0_29 = arith.constant 0 : index
      %36 = vector.load %arg8[%c0_27, %c0_28, %c0_29] : memref<1x56x6xf32, #tpu.memory_space<vmem>>, vector<1x56x6xf32>
      %37 = vector.shape_cast %36 : vector<1x56x6xf32> to vector<1x1x1x56x6xf32>
      %c0_30 = arith.constant 0 : index
      %c0_31 = arith.constant 0 : index
      %c0_32 = arith.constant 0 : index
      %c0_33 = arith.constant 0 : index
      %c0_34 = arith.constant 0 : index
      %38 = vector.load %arg7[%c0_30, %c0_31, %c0_32, %c0_33, %c0_34] : memref<1x1x1x56x6xf32, #tpu.memory_space<vmem>>, vector<1x1x1x56x6xf32>
      tpu.vector_store %arg7[%c0_30, %c0_31, %c0_32, %c0_33, %c0_34], %37 {strides = array<i32>} : memref<1x1x1x56x6xf32, #tpu.memory_space<vmem>>, vector<1x1x1x56x6xf32>,
    } else {
    }
    return
  }
  func.func @transform_0(%arg0: i32, %arg1: i32, %arg2: i32, %arg3: memref<1xi32, #tpu.memory_space<smem>>) -> (i32, i32, i32, i32) {
    %0 = arith.index_cast %arg2 : i32 to index
    %1 = memref.load %arg3[%0] : memref<1xi32, #tpu.memory_space<smem>>
    %2 = arith.addi %arg1, %1 : i32
    %c0_i32 = arith.constant 0 : i32
    %c0_i32_0 = arith.constant 0 : i32
    %c0_i32_1 = arith.constant 0 : i32
    return %arg0, %2, %c0_i32, %c0_i32_0 : i32, i32, i32, i32
  }
  func.func @transform_1(%arg0: i32, %arg1: i32, %arg2: i32, %arg3: memref<1xi32, #tpu.memory_space<smem>>) -> (i32, i32, i32) {
    %c0_i32 = arith.constant 0 : i32
    %c0_i32_0 = arith.constant 0 : i32
    %c0_i32_1 = arith.constant 0 : i32
    %c0_i32_2 = arith.constant 0 : i32
    return %c0_i32, %c0_i32_0, %c0_i32_1 : i32, i32, i32
  }
  func.func @transform_2(%arg0: i32, %arg1: i32, %arg2: i32, %arg3: memref<1xi32, #tpu.memory_space<smem>>) -> (i32, i32) {
    %c0_i32 = arith.constant 0 : i32
    %c0_i32_0 = arith.constant 0 : i32
    %c0_i32_1 = arith.constant 0 : i32
    return %c0_i32, %c0_i32_0 : i32, i32
  }
  func.func @transform_3(%arg0: i32, %arg1: i32, %arg2: i32, %arg3: memref<1xi32, #tpu.memory_space<smem>>) -> (i32, i32, i32, i32, i32) {
    %c0_i32 = arith.constant 0 : i32
    %c0_i32_0 = arith.constant 0 : i32
    %c0_i32_1 = arith.constant 0 : i32
    %c0_i32_2 = arith.constant 0 : i32
    return %arg0, %arg1, %c0_i32, %c0_i32_0, %c0_i32_1 : i32, i32, i32, i32, i32
  }
}

</mosaic_0001>

<llo_original>
// kernel: conv_transpose3d_pallas.2
$region0: #{conv_transpose3d_pallas.2}
  #allocation0 [shape = 'u32[]', space=smem, size = 0x4, offset = 0x4, fixed_abs, tag = 'smem constant byte address 0x4 - core index']
  #allocation1 [shape = 'u32[144,128]{1,0:T(1,128)}', space=vmem, size = 0x12000, scoped, tag = 'internal scratch']
  #allocation2 [shape = 'f32[1,56,6]{2,1,0:T(8,128)}', space=vmem, size = 0x7000, scoped, tag = 'scratch operand']
  #allocation3 [shape = 's32[1]{0}', space=sflag, size = 0x4, scoped, tag = 'scoped memory for conv_transpose3d_pallas.2']
  #allocation4 [shape = 'u8[512]{0}', space=smem, size = 0x200, scoped, tag = 'prefetched SMEM operand 0']
  %s0 = inlined_call_operand.vmem [shape: s32[2], index: 0, kind: input, shape index: {}]
  %s1 = inlined_call_operand.vmem [shape: f32[2,7,72,12], index: 1, kind: input, shape index: {}]
  %s2 = inlined_call_operand.vmem [shape: f32[6,12,6], index: 2, kind: input, shape index: {}]
  %s3 = inlined_call_operand.vmem [shape: f32[1,6], index: 3, kind: input, shape index: {}]
  %s4 = inlined_call_operand.vmem [shape: f32[2,6,1,56,6], index: 4, kind: output, shape index: {}]
  %s5 = sld [smem:[#allocation0]]
  $region53: #{conv_transpose3d_pallas.2} parent=0
    _
  %s7 = ssub.s32 1, %s5
  %s8 = scalar_select 0, %s7, %s5
  %s9 = sshll.u32 %s0, 4
  %s10 = int_to_ptr.vmem [resolvable:$true] %s9
  %12 = dma.vmem_to_smem %s10, 16, [#allocation4], [#allocation3]
  %13 = dma.done [#allocation3], 16
  %14 = sfence
  loop: start=0, step=1, limit=26
  $region2: #{conv_transpose3d_pallas.2} parent=0 // loop_pre_header
    _
  $region3: #{conv_transpose3d_pallas.2} parent=0 // loop_header
    %s16 = sphi 0, %s20
    %p17 = scmp.ge.s32.totalorder %s16, 26
    %s23 = sphi 0, %s42
    %s24 = sphi 0, %s38
    %s25 = sphi 0, %s34
    %s26 = sphi 0, %s23
    %s27 = sphi 0, %s24
    %s28 = sphi 0, %s25
    %s29 = sphi 0, %s26
    %s30 = sphi 0, %s27
    %s31 = sphi 0, %s28
    %s51 = sphi 0, %s53
    %s54 = sphi 0, %s51
    %s55 = sphi 0, %s54
    %s71 = sphi 0, %s55
    %s75 = sphi 0, %s75
    %s77 = sphi 0, %s75
    %s78 = sphi 0, %s77
    %s92 = sphi 0, %s78
    %s96 = sphi 0, %s96
    %s98 = sphi 0, %s96
    %s99 = sphi 0, %s98
    %s113 = sphi 0, %s99
    %s121 = sphi 0, %s123
    %s124 = sphi 0, %s121
    %s125 = sphi 0, %s124
    %s141 = sphi 0, %s125
  $region4: #{conv_transpose3d_pallas.2} parent=0 // loop_header_branch
    %19 = sbr.rel (%p17) target = $region8
  $region5: #{conv_transpose3d_pallas.2} parent=0 // loop_body
    %s21 = ssub.s32 %s16, 1
    %s22 = ssub.s32 %s16, 2
    %s32 = sadd.s32 1, %s25
    %p33 = scmp.ge.s32.totalorder %s32, 2
    %s34 = scalar_select %p33, 0, %s32
    %s35 = sadd.s32 1, %s24
    %s36 = scalar_select %p33, %s35, %s24
    %p37 = scmp.ge.s32.totalorder %s36, 6
    %s38 = scalar_select %p37, 0, %s36
    %s39 = sadd.s32 1, %s23
    %s40 = scalar_select %p37, %s39, %s23
    %p41 = scmp.ge.s32.totalorder %s40, 2
    %s42 = scalar_select %p41, 0, %s40
    %s43 = sld [smem:[#allocation4 + %s25]]
    %s44 = sadd.s32 %s24, %s43
    %s45 = sld [smem:[#allocation4 + %s34]]
    %s46 = sadd.s32 %s38, %s45
    %s47 = ssub.s32 %s23, %s42
    %s48 = ssub.s32 %s44, %s46
    %s49 = sor.u32 %s47, %s48
    %p50 = scmp.eq.s32.totalorder %s49, 0
    %s52 = sadd.s32 %s51, 1
    %s53 = scalar_select %p50, %s51, %s52
    %p56 = pneg %p50
    %p57 = scmp.eq.s32.totalorder %s16, 23
    %p58 = por %p56, %p57
    %p59 = scmp.ne.s32.totalorder %s51, %s54
    %p60 = scmp.eq.s32.totalorder %s16, 0
    %p61 = por %p59, %p60
    %p62 = scmp.ne.s32.totalorder %s51, %s54
    %p63 = scmp.eq.s32.totalorder %s21, 23
    %p64 = por %p62, %p63
    %p65 = scmp.ne.s32.totalorder %s54, %s55
    %p66 = scmp.eq.s32.totalorder %s21, 0
    %p67 = por %p65, %p66
    %p68 = scmp.ne.s32.totalorder %s54, %s55
    %p69 = scmp.eq.s32.totalorder %s22, 23
    %p70 = por %p68, %p69
    %p72 = scmp.ne.s32.totalorder %s55, %s71
    %p73 = scmp.eq.s32.totalorder %s22, 0
    %p74 = por %p72, %p73
    %s76 = sadd.s32 %s75, 1
    %p79 = scmp.eq.s32.totalorder %s16, 23
    %p80 = scmp.ne.s32.totalorder %s75, %s77
    %p81 = scmp.eq.s32.totalorder %s16, 0
    %p82 = por %p80, %p81
    %p83 = scmp.ne.s32.totalorder %s75, %s77
    %p84 = scmp.eq.s32.totalorder %s21, 23
    %p85 = por %p83, %p84
    %p86 = scmp.ne.s32.totalorder %s77, %s78
    %p87 = scmp.eq.s32.totalorder %s21, 0
    %p88 = por %p86, %p87
    %p89 = scmp.ne.s32.totalorder %s77, %s78
    %p90 = scmp.eq.s32.totalorder %s22, 23
    %p91 = por %p89, %p90
    %p93 = scmp.ne.s32.totalorder %s78, %s92
    %p94 = scmp.eq.s32.totalorder %s22, 0
    %p95 = por %p93, %p94
    %s97 = sadd.s32 %s96, 1
    %p100 = scmp.eq.s32.totalorder %s16, 23
    %p101 = scmp.ne.s32.totalorder %s96, %s98
    %p102 = scmp.eq.s32.totalorder %s16, 0
    %p103 = por %p101, %p102
    %p104 = scmp.ne.s32.totalorder %s96, %s98
    %p105 = scmp.eq.s32.totalorder %s21, 23
    %p106 = por %p104, %p105
    %p107 = scmp.ne.s32.totalorder %s98, %s99
    %p108 = scmp.eq.s32.totalorder %s21, 0
    %p109 = por %p107, %p108
    %p110 = scmp.ne.s32.totalorder %s98, %s99
    %p111 = scmp.eq.s32.totalorder %s22, 23
    %p112 = por %p110, %p111
    %p114 = scmp.ne.s32.totalorder %s99, %s113
    %p115 = scmp.eq.s32.totalorder %s22, 0
    %p116 = por %p114, %p115
    %s117 = ssub.s32 %s23, %s42
    %s118 = ssub.s32 %s24, %s38
    %s119 = sor.u32 %s117, %s118
    %p120 = scmp.eq.s32.totalorder %s119, 0
    %s122 = sadd.s32 %s121, 1
    %s123 = scalar_select %p120, %s121, %s122
    %p126 = pneg %p120
    %p127 = scmp.eq.s32.totalorder %s16, 23
    %p128 = por %p126, %p127
    %p129 = scmp.ne.s32.totalorder %s121, %s124
    %p130 = scmp.eq.s32.totalorder %s16, 0
    %p131 = por %p129, %p130
    %p132 = scmp.ne.s32.totalorder %s121, %s124
    %p133 = scmp.eq.s32.totalorder %s21, 23
    %p134 = por %p132, %p133
    %p135 = scmp.ne.s32.totalorder %s124, %s125
    %p136 = scmp.eq.s32.totalorder %s21, 0
    %p137 = por %p135, %p136
    %p138 = scmp.ne.s32.totalorder %s124, %s125
    %p139 = scmp.eq.s32.totalorder %s22, 23
    %p140 = por %p138, %p139
    %p142 = scmp.ne.s32.totalorder %s125, %s141
    %p143 = scmp.eq.s32.totalorder %s22, 0
    %p144 = por %p142, %p143
    %p145 = scmp.le.s32.totalorder 1, %s16
    %p146 = scmp.lt.s32.totalorder %s16, 25
    %p147 = pnand %p145, %p146
    %p148 = pneg %p147
    // Predicated region
    $region9: #{conv_transpose3d_pallas.2} parent=5 // pred_check
      _
    $region10: #{conv_transpose3d_pallas.2} parent=5 // pred_check_branch
      %150 = sbr.rel (%p147) target = $region12
    $region11: #{conv_transpose3d_pallas.2} parent=5 // pred_region
      %s151 = ssub.s32 %s16, 1
      // Predicated region
      $region13: #{conv_transpose3d_pallas.2} parent=11 // pred_check
        %p152 = pneg %p88
      $region14: #{conv_transpose3d_pallas.2} parent=11 // pred_check_branch
        %154 = sbr.rel (%p152) target = $region16
      $region15: #{conv_transpose3d_pallas.2} parent=11 // pred_region
        _
      $region16: #{conv_transpose3d_pallas.2} parent=11 // pred_fallthru
        _
      // Predicated region
      $region17: #{conv_transpose3d_pallas.2} parent=11 // pred_check
        %p155 = pneg %p109
      $region18: #{conv_transpose3d_pallas.2} parent=11 // pred_check_branch
        %157 = sbr.rel (%p155) target = $region20
      $region19: #{conv_transpose3d_pallas.2} parent=11 // pred_region
        _
      $region20: #{conv_transpose3d_pallas.2} parent=11 // pred_fallthru
        _
    $region12: #{conv_transpose3d_pallas.2} parent=5 // pred_fallthru
      _
    %p158 = scmp.lt.s32.totalorder %s16, 24
    // Predicated region
    $region21: #{conv_transpose3d_pallas.2} parent=5 // pred_check
      %p159 = pneg %p158
    $region22: #{conv_transpose3d_pallas.2} parent=5 // pred_check_branch
      %161 = sbr.rel (%p159) target = $region24
    $region23: #{conv_transpose3d_pallas.2} parent=5 // pred_region
      // Predicated region
      $region25: #{conv_transpose3d_pallas.2} parent=23 // pred_check
        %p162 = pneg %p61
      $region26: #{conv_transpose3d_pallas.2} parent=23 // pred_check_branch
        %164 = sbr.rel (%p162) target = $region28
      $region27: #{conv_transpose3d_pallas.2} parent=23 // pred_region
        %s165 = sld [smem:[#allocation4 + %s25]]
        %s166 = sadd.s32 %s24, %s165
        %p167 = scmp.lt.s32.totalorder %s23, 1
        %s168 = scalar_select %p167, %s23, 1
        %p169 = scmp.lt.s32.totalorder %s166, 6
        %s170 = scalar_select %p169, %s166, 6
        %s171 = smul.addr %s170, 9
        %s172 = smul.addr %s168, 63
        %s173 = sadd.s32 %s171, %s172
        %s174 = smul.addr %s173, 8
        %s175 = scalar_lea.vmem %s1, %s174
        %s176 = sld [smem:[#allocation4 + %s25]]
        %s177 = sadd.s32 %s24, %s176
      $region28: #{conv_transpose3d_pallas.2} parent=23 // pred_fallthru
        _
    $region24: #{conv_transpose3d_pallas.2} parent=5 // pred_fallthru
      _
    %p178 = scmp.le.s32.totalorder 1, %s16
    %p179 = scmp.lt.s32.totalorder %s16, 25
    %p180 = pnand %p178, %p179
    %p181 = pneg %p180
    // Predicated region
    $region29: #{conv_transpose3d_pallas.2} parent=5 // pred_check
      _
    $region30: #{conv_transpose3d_pallas.2} parent=5 // pred_check_branch
      %183 = sbr.rel (%p180) target = $region32
    $region31: #{conv_transpose3d_pallas.2} parent=5 // pred_region
      %s184 = ssub.s32 %s16, 1
      %s185 = sld [smem:[#allocation4 + %s28]]
      %s186 = sadd.s32 %s27, %s185
      %p187 = scmp.lt.s32.totalorder %s26, 1
      %s188 = scalar_select %p187, %s26, 1
      %p189 = scmp.lt.s32.totalorder %s186, 6
      %s190 = scalar_select %p189, %s186, 6
      %s191 = smul.addr %s190, 9
      %s192 = smul.addr %s188, 63
      %s193 = sadd.s32 %s191, %s192
      %s194 = smul.addr %s193, 8
      %s195 = scalar_lea.vmem %s1, %s194
      %p196 = pneg %p67
      %p197 = pneg %p64
      %p198 = pneg %p88
      %p199 = pneg %p85
      %p200 = pneg %p109
      %p201 = pneg %p106
      %p202 = pneg %p137
      %p203 = pneg %p134
      %p204 = scmp.lt.s32.totalorder %s26, 1
      %s205 = scalar_select %p204, %s26, 1
      %p206 = scmp.lt.s32.totalorder %s27, 5
      %s207 = scalar_select %p206, %s27, 5
      %s208 = smul.addr %s207, 7
      %s209 = smul.addr %s205, 42
      %s210 = sadd.s32 %s208, %s209
      %s211 = smul.addr %s210, 8
      %s212 = scalar_lea.vmem %s4, %s211
      %s213 = sld [smem:[#allocation4 + %s28]]
      %s214 = sadd.s32 %s27, %s213
      %p215 = scmp.lt.s32.totalorder %s26, 1
      %s216 = scalar_select %p215, %s26, 1
      %p217 = scmp.lt.s32.totalorder %s214, 6
      %s218 = scalar_select %p217, %s214, 6
      %s219 = smul.addr %s218, 9
      %s220 = smul.addr %s216, 63
      %s221 = sadd.s32 %s219, %s220
      %s222 = smul.addr %s221, 8
      %s223 = scalar_lea.vmem %s1, %s222
      %s224 = sld [smem:[#allocation4 + %s28]]
      %s225 = sadd.s32 %s27, %s224
      %p226 = scmp.lt.s32.totalorder %s26, 1
      %s227 = scalar_select %p226, %s26, 1
      %p228 = scmp.lt.s32.totalorder %s27, 5
      %s229 = scalar_select %p228, %s27, 5
      %s230 = smul.addr %s229, 7
      %s231 = smul.addr %s227, 42
      %s232 = sadd.s32 %s230, %s231
      %s233 = smul.addr %s232, 8
      %s234 = scalar_lea.vmem %s4, %s233
      %p235 = scmp.eq.s32.totalorder %s28, 0
      // Predicated region
      $region33: #{conv_transpose3d_pallas.2} parent=31 // pred_check
        %p236 = pneg %p235
      $region34: #{conv_transpose3d_pallas.2} parent=31 // pred_check_branch
        %238 = sbr.rel (%p236) target = $region36
      $region35: #{conv_transpose3d_pallas.2} parent=31 // pred_region
        %v239 = vld [vmem:[%s3] sm:$0x1]
        %v241 = vlaneseq
        %v242 = vshrl.u32 %v241, 7
        %v243 = vsub.s32 0, %v242
        %v244 = vrot.slane %v239, %v243
        %vm246 = vcmask 48128
        %247 = vst.msk [vmem:[#allocation2] sm:$0xff] %vm246, %v244
        %248 = vst.msk [vmem:[#allocation2 + $0x8] sm:$0xff] %vm246, %v244
        %249 = vst.msk [vmem:[#allocation2 + $0x10] sm:$0xff] %vm246, %v244
        %250 = vst.msk [vmem:[#allocation2 + $0x18] sm:$0xff] %vm246, %v244
        %251 = vst.msk [vmem:[#allocation2 + $0x20] sm:$0xff] %vm246, %v244
        %252 = vst.msk [vmem:[#allocation2 + $0x28] sm:$0xff] %vm246, %v244
        %253 = vst.msk [vmem:[#allocation2 + $0x30] sm:$0xff] %vm246, %v244
      $region36: #{conv_transpose3d_pallas.2} parent=31 // pred_fallthru
        _
      %s254 = smul.u32 %s28, 3
      %v255 = vld [vmem:[%s223 + $0x10] sm:$0xff]
      %v256 = vld [vmem:[%s223 + $0x18] sm:$0xff]
      %v257 = vld [vmem:[%s223 + $0x20] sm:$0xff]
      %v258 = vld [vmem:[%s223 + $0x28] sm:$0xff]
      %v259 = vld [vmem:[%s223 + $0x30] sm:$0xff]
      %v260 = vld [vmem:[%s223 + $0x38] sm:$0xff]
      %v261 = vld [vmem:[%s223 + $0x40] sm:$0xff]
      %s262 = smul.u32 %s254, 16
      %s263 = scalar_lea.vmem %s2, %s262
      %v264 = vld [vmem:[%s263] sm:$0xff]
      %v265 = vld [vmem:[%s263 + $0x8] sm:$0xf]
      %v266 = vld [vmem:[%s223 + $0x8] sm:$0xff]
      %s267 = sadd.s32 %s254, 1
      %s268 = smul.u32 %s267, 16
      %s269 = scalar_lea.vmem %s2, %s268
      %v270 = vld [vmem:[%s269] sm:$0xff]
      %v271 = vld [vmem:[%s269 + $0x8] sm:$0xf]
      %vm272 = vcmask 97280
      %v274 = vsel %vm272, %v266, 0
      %v277 = vsel %vm272, %v255, 0
      %v280 = vsel %vm272, %v256, 0
      %v283 = vsel %vm272, %v257, 0
      %v286 = vsel %vm272, %v258, 0
      %v289 = vsel %vm272, %v259, 0
      %v292 = vsel %vm272, %v260, 0
      %vm294 = vcmask 1043456
      %v296 = vsel %vm294, %v271, 0
      %298 = vmatprep.subr.mxu0 0.0
      %299 = vmatpush1.msra.mxu0 %v270
      %300 = vmatprep.subr.mxu0 0.0
      %301 = vmatpush1.msra.mxu0 %v296
      %302 = vmatprep.subr.mxu0 0.0
      %303 = vmatpush1.msra.mxu0 0.0
      %304 = vmatprep.subr.mxu0 0.0
      %305 = vmatpush1.msra.mxu0 0.0
      %306 = vmatprep.subr.mxu0 0.0
      %307 = vmatpush1.msra.mxu0 0.0
      %308 = vmatprep.subr.mxu0 0.0
      %309 = vmatpush1.msra.mxu0 0.0
      %310 = vmatprep.subr.mxu0 0.0
      %311 = vmatpush1.msra.mxu0 0.0
      %312 = vmatprep.subr.mxu0 0.0
      %313 = vmatpush1.msra.mxu0 0.0
      %314 = vmatprep.subr.mxu0 0.0
      %315 = vmatpush1.msra.mxu0 0.0
      %316 = vmatprep.subr.mxu0 0.0
      %317 = vmatpush1.msra.mxu0 0.0
      %318 = vmatprep.subr.mxu0 0.0
      %319 = vmatpush1.msra.mxu0 0.0
      %320 = vmatprep.subr.mxu0 0.0
      %321 = vmatpush1.msra.mxu0 0.0
      %322 = vmatprep.subr.mxu0 0.0
      %323 = vmatpush1.msra.mxu0 0.0
      %324 = vmatprep.subr.mxu0 0.0
      %325 = vmatpush1.msra.mxu0 0.0
      %326 = vmatprep.subr.mxu0 0.0
      %327 = vmatpush1.msra.mxu0 0.0
      %328 = vmatprep.subr.mxu0 0.0
      %329 = vmatpush1.msra.mxu0 0.0
      %330 = vmatprep.subr.mxu0 0.0
      %331 = vmatpush1.msra.mxu0 0.0
      %332 = vmatprep.subr.mxu0 0.0
      %333 = vmatpush1.msra.mxu0 0.0
      %334 = vmatprep.subr.mxu0 0.0
      %335 = vmatpush1.msra.mxu0 0.0
      %336 = vmatprep.subr.mxu0 0.0
      %337 = vmatpush1.msra.mxu0 0.0
      %338 = vmatprep.subr.mxu0 0.0
      %339 = vmatpush1.msra.mxu0 0.0
      %340 = vmatprep.subr.mxu0 0.0
      %341 = vmatpush1.msra.mxu0 0.0
      %342 = vmatprep.subr.mxu0 0.0
      %343 = vmatpush1.msra.mxu0 0.0
      %344 = vmatprep.subr.mxu0 0.0
      %345 = vmatpush1.msra.mxu0 0.0
      %346 = vmatprep.subr.mxu0 0.0
      %347 = vmatpush1.msra.mxu0 0.0
      %348 = vmatprep.subr.mxu0 0.0
      %349 = vmatpush1.msra.mxu0 0.0
      %350 = vmatprep.subr.mxu0 0.0
      %351 = vmatpush1.msra.mxu0 0.0
      %352 = vmatprep.subr.mxu0 0.0
      %353 = vmatpush1.msra.mxu0 0.0
      %354 = vmatprep.subr.mxu0 0.0
      %355 = vmatpush1.msra.mxu0 0.0
      %356 = vmatprep.subr.mxu0 0.0
      %357 = vmatpush1.msra.mxu0 0.0
      %358 = vmatprep.subr.mxu0 0.0
      %359 = vmatpush1.msra.mxu0 0.0
      %360 = vmatprep.subr.mxu0 0.0
      %361 = vmatpush1.msra.mxu0 0.0
      %362 = vmatprep.mubr.f32.mxu0 0.0
      %363 = vmatmul.mubr.f32.gmra.mrb[0].mxu0 %v274
      %v364 = vpop.f32.mrb[0].mxu0
      %v365 = vadd.f32 0.0, %v364
      %v366 = vpop.f32.mrb[0].mxu0
      %367 = vmatprep.mubr.f32.mxu0 0.0
      %368 = vmatmul.mubr.f32.gmra.mrb[0].mxu0 %v277
      %v369 = vpop.f32.mrb[0].mxu0
      %v370 = vadd.f32 0.0, %v369
      %v371 = vpop.f32.mrb[0].mxu0
      %372 = vmatprep.mubr.f32.mxu0 0.0
      %373 = vmatmul.mubr.f32.gmra.mrb[0].mxu0 %v280
      %v374 = vpop.f32.mrb[0].mxu0
      %v375 = vadd.f32 0.0, %v374
      %v376 = vpop.f32.mrb[0].mxu0
      %377 = vmatprep.mubr.f32.mxu0 0.0
      %378 = vmatmul.mubr.f32.gmra.mrb[0].mxu0 %v283
      %v379 = vpop.f32.mrb[0].mxu0
      %v380 = vadd.f32 0.0, %v379
      %v381 = vpop.f32.mrb[0].mxu0
      %382 = vmatprep.mubr.f32.mxu0 0.0
      %383 = vmatmul.mubr.f32.gmra.mrb[0].mxu0 %v286
      %v384 = vpop.f32.mrb[0].mxu0
      %v385 = vadd.f32 0.0, %v384
      %v386 = vpop.f32.mrb[0].mxu0
      %387 = vmatprep.mubr.f32.mxu0 0.0
      %388 = vmatmul.mubr.f32.gmra.mrb[0].mxu0 %v289
      %v389 = vpop.f32.mrb[0].mxu0
      %v390 = vadd.f32 0.0, %v389
      %v391 = vpop.f32.mrb[0].mxu0
      %392 = vmatprep.mubr.f32.mxu0 0.0
      %393 = vmatmul.mubr.f32.gmra.mrb[0].mxu0 %v292
      %v394 = vpop.f32.mrb[0].mxu0
      %v395 = vadd.f32 0.0, %v394
      %v396 = vpop.f32.mrb[0].mxu0
      %397 = vdwg.mxu0
      %v399 = vsel %vm272, %v261, 0
      %v402 = vsel %vm294, %v265, 0
      %404 = vmatprep.subr.mxu0 0.0
      %405 = vmatpush1.msra.mxu0 %v264
      %406 = vmatprep.subr.mxu0 0.0
      %407 = vmatpush1.msra.mxu0 %v402
      %408 = vmatprep.subr.mxu0 0.0
      %409 = vmatpush1.msra.mxu0 0.0
      %410 = vmatprep.subr.mxu0 0.0
      %411 = vmatpush1.msra.mxu0 0.0
      %412 = vmatprep.subr.mxu0 0.0
      %413 = vmatpush1.msra.mxu0 0.0
      %414 = vmatprep.subr.mxu0 0.0
      %415 = vmatpush1.msra.mxu0 0.0
      %416 = vmatprep.subr.mxu0 0.0
      %417 = vmatpush1.msra.mxu0 0.0
      %418 = vmatprep.subr.mxu0 0.0
      %419 = vmatpush1.msra.mxu0 0.0
      %420 = vmatprep.subr.mxu0 0.0
      %421 = vmatpush1.msra.mxu0 0.0
      %422 = vmatprep.subr.mxu0 0.0
      %423 = vmatpush1.msra.mxu0 0.0
      %424 = vmatprep.subr.mxu0 0.0
      %425 = vmatpush1.msra.mxu0 0.0
      %426 = vmatprep.subr.mxu0 0.0
      %427 = vmatpush1.msra.mxu0 0.0
      %428 = vmatprep.subr.mxu0 0.0
      %429 = vmatpush1.msra.mxu0 0.0
      %430 = vmatprep.subr.mxu0 0.0
      %431 = vmatpush1.msra.mxu0 0.0
      %432 = vmatprep.subr.mxu0 0.0
      %433 = vmatpush1.msra.mxu0 0.0
      %434 = vmatprep.subr.mxu0 0.0
      %435 = vmatpush1.msra.mxu0 0.0
      %436 = vmatprep.subr.mxu0 0.0
      %437 = vmatpush1.msra.mxu0 0.0
      %438 = vmatprep.subr.mxu0 0.0
      %439 = vmatpush1.msra.mxu0 0.0
      %440 = vmatprep.subr.mxu0 0.0
      %441 = vmatpush1.msra.mxu0 0.0
      %442 = vmatprep.subr.mxu0 0.0
      %443 = vmatpush1.msra.mxu0 0.0
      %444 = vmatprep.subr.mxu0 0.0
      %445 = vmatpush1.msra.mxu0 0.0
      %446 = vmatprep.subr.mxu0 0.0
      %447 = vmatpush1.msra.mxu0 0.0
      %448 = vmatprep.subr.mxu0 0.0
      %449 = vmatpush1.msra.mxu0 0.0
      %450 = vmatprep.subr.mxu0 0.0
      %451 = vmatpush1.msra.mxu0 0.0
      %452 = vmatprep.subr.mxu0 0.0
      %453 = vmatpush1.msra.mxu0 0.0
      %454 = vmatprep.subr.mxu0 0.0
      %455 = vmatpush1.msra.mxu0 0.0
      %456 = vmatprep.subr.mxu0 0.0
      %457 = vmatpush1.msra.mxu0 0.0
      %458 = vmatprep.subr.mxu0 0.0
      %459 = vmatpush1.msra.mxu0 0.0
      %460 = vmatprep.subr.mxu0 0.0
      %461 = vmatpush1.msra.mxu0 0.0
      %462 = vmatprep.subr.mxu0 0.0
      %463 = vmatpush1.msra.mxu0 0.0
      %464 = vmatprep.subr.mxu0 0.0
      %465 = vmatpush1.msra.mxu0 0.0
      %466 = vmatprep.subr.mxu0 0.0
      %467 = vmatpush1.msra.mxu0 0.0
      %468 = vmatprep.mubr.f32.mxu0 0.0
      %469 = vmatmul.mubr.f32.gmra.mrb[0].mxu0 %v277
      %v470 = vpop.f32.mrb[0].mxu0
      %v471 = vadd.f32 %v365, %v470
      %v472 = vpop.f32.mrb[0].mxu0
      %473 = vmatprep.mubr.f32.mxu0 0.0
      %474 = vmatmul.mubr.f32.gmra.mrb[0].mxu0 %v280
      %v475 = vpop.f32.mrb[0].mxu0
      %v476 = vadd.f32 %v370, %v475
      %v477 = vpop.f32.mrb[0].mxu0
      %478 = vmatprep.mubr.f32.mxu0 0.0
      %479 = vmatmul.mubr.f32.gmra.mrb[0].mxu0 %v283
      %v480 = vpop.f32.mrb[0].mxu0
      %v481 = vadd.f32 %v375, %v480
      %v482 = vpop.f32.mrb[0].mxu0
      %483 = vmatprep.mubr.f32.mxu0 0.0
      %484 = vmatmul.mubr.f32.gmra.mrb[0].mxu0 %v286
      %v485 = vpop.f32.mrb[0].mxu0
      %v486 = vadd.f32 %v380, %v485
      %v487 = vpop.f32.mrb[0].mxu0
      %488 = vmatprep.mubr.f32.mxu0 0.0
      %489 = vmatmul.mubr.f32.gmra.mrb[0].mxu0 %v289
      %v490 = vpop.f32.mrb[0].mxu0
      %v491 = vadd.f32 %v385, %v490
      %v492 = vpop.f32.mrb[0].mxu0
      %493 = vmatprep.mubr.f32.mxu0 0.0
      %494 = vmatmul.mubr.f32.gmra.mrb[0].mxu0 %v292
      %v495 = vpop.f32.mrb[0].mxu0
      %v496 = vadd.f32 %v390, %v495
      %v497 = vpop.f32.mrb[0].mxu0
      %498 = vmatprep.mubr.f32.mxu0 0.0
      %499 = vmatmul.mubr.f32.gmra.mrb[0].mxu0 %v399
      %v500 = vpop.f32.mrb[0].mxu0
      %v501 = vadd.f32 %v395, %v500
      %v502 = vpop.f32.mrb[0].mxu0
      %503 = vdwg.mxu0
      %v504 = vld [vmem:[%s223] sm:$0xff]
      %v505 = vld [vmem:[%s223 + $0x8] sm:$0xff]
      %v506 = vld [vmem:[%s223 + $0x10] sm:$0xff]
      %v507 = vld [vmem:[%s223 + $0x18] sm:$0xff]
      %v508 = vld [vmem:[%s223 + $0x20] sm:$0xff]
      %v509 = vld [vmem:[%s223 + $0x28] sm:$0xff]
      %v510 = vld [vmem:[%s223 + $0x30] sm:$0xff]
      %s511 = sadd.s32 %s254, 2
      %s512 = smul.u32 %s511, 16
      %s513 = scalar_lea.vmem %s2, %s512
      %v514 = vld [vmem:[%s513] sm:$0xff]
      %v515 = vld [vmem:[%s513 + $0x8] sm:$0xf]
      %v517 = vsel %vm272, %v504, 0
      %v520 = vsel %vm272, %v505, 0
      %v523 = vsel %vm272, %v506, 0
      %v526 = vsel %vm272, %v507, 0
      %v529 = vsel %vm272, %v508, 0
      %v532 = vsel %vm272, %v509, 0
      %v535 = vsel %vm272, %v510, 0
      %v538 = vsel %vm294, %v515, 0
      %540 = vmatprep.subr.mxu0 0.0
      %541 = vmatpush1.msra.mxu0 %v514
      %542 = vmatprep.subr.mxu0 0.0
      %543 = vmatpush1.msra.mxu0 %v538
      %544 = vmatprep.subr.mxu0 0.0
      %545 = vmatpush1.msra.mxu0 0.0
      %546 = vmatprep.subr.mxu0 0.0
      %547 = vmatpush1.msra.mxu0 0.0
      %548 = vmatprep.subr.mxu0 0.0
      %549 = vmatpush1.msra.mxu0 0.0
      %550 = vmatprep.subr.mxu0 0.0
      %551 = vmatpush1.msra.mxu0 0.0
      %552 = vmatprep.subr.mxu0 0.0
      %553 = vmatpush1.msra.mxu0 0.0
      %554 = vmatprep.subr.mxu0 0.0
      %555 = vmatpush1.msra.mxu0 0.0
      %556 = vmatprep.subr.mxu0 0.0
      %557 = vmatpush1.msra.mxu0 0.0
      %558 = vmatprep.subr.mxu0 0.0
      %559 = vmatpush1.msra.mxu0 0.0
      %560 = vmatprep.subr.mxu0 0.0
      %561 = vmatpush1.msra.mxu0 0.0
      %562 = vmatprep.subr.mxu0 0.0
      %563 = vmatpush1.msra.mxu0 0.0
      %564 = vmatprep.subr.mxu0 0.0
      %565 = vmatpush1.msra.mxu0 0.0
      %566 = vmatprep.subr.mxu0 0.0
      %567 = vmatpush1.msra.mxu0 0.0
      %568 = vmatprep.subr.mxu0 0.0
      %569 = vmatpush1.msra.mxu0 0.0
      %570 = vmatprep.subr.mxu0 0.0
      %571 = vmatpush1.msra.mxu0 0.0
      %572 = vmatprep.subr.mxu0 0.0
      %573 = vmatpush1.msra.mxu0 0.0
      %574 = vmatprep.subr.mxu0 0.0
      %575 = vmatpush1.msra.mxu0 0.0
      %576 = vmatprep.subr.mxu0 0.0
      %577 = vmatpush1.msra.mxu0 0.0
      %578 = vmatprep.subr.mxu0 0.0
      %579 = vmatpush1.msra.mxu0 0.0
      %580 = vmatprep.subr.mxu0 0.0
      %581 = vmatpush1.msra.mxu0 0.0
      %582 = vmatprep.subr.mxu0 0.0
      %583 = vmatpush1.msra.mxu0 0.0
      %584 = vmatprep.subr.mxu0 0.0
      %585 = vmatpush1.msra.mxu0 0.0
      %586 = vmatprep.subr.mxu0 0.0
      %587 = vmatpush1.msra.mxu0 0.0
      %588 = vmatprep.subr.mxu0 0.0
      %589 = vmatpush1.msra.mxu0 0.0
      %590 = vmatprep.subr.mxu0 0.0
      %591 = vmatpush1.msra.mxu0 0.0
      %592 = vmatprep.subr.mxu0 0.0
      %593 = vmatpush1.msra.mxu0 0.0
      %594 = vmatprep.subr.mxu0 0.0
      %595 = vmatpush1.msra.mxu0 0.0
      %596 = vmatprep.subr.mxu0 0.0
      %597 = vmatpush1.msra.mxu0 0.0
      %598 = vmatprep.subr.mxu0 0.0
      %599 = vmatpush1.msra.mxu0 0.0
      %600 = vmatprep.subr.mxu0 0.0
      %601 = vmatpush1.msra.mxu0 0.0
      %602 = vmatprep.subr.mxu0 0.0
      %603 = vmatpush1.msra.mxu0 0.0
      %604 = vmatprep.mubr.f32.mxu0 0.0
      %605 = vmatmul.mubr.f32.gmra.mrb[0].mxu0 %v517
      %v606 = vpop.f32.mrb[0].mxu0
      %v607 = vadd.f32 0.0, %v606
      %v608 = vpop.f32.mrb[0].mxu0
      %609 = vmatprep.mubr.f32.mxu0 0.0
      %610 = vmatmul.mubr.f32.gmra.mrb[0].mxu0 %v520
      %v611 = vpop.f32.mrb[0].mxu0
      %v612 = vadd.f32 0.0, %v611
      %v613 = vpop.f32.mrb[0].mxu0
      %614 = vmatprep.mubr.f32.mxu0 0.0
      %615 = vmatmul.mubr.f32.gmra.mrb[0].mxu0 %v523
      %v616 = vpop.f32.mrb[0].mxu0
      %v617 = vadd.f32 0.0, %v616
      %v618 = vpop.f32.mrb[0].mxu0
      %619 = vmatprep.mubr.f32.mxu0 0.0
      %620 = vmatmul.mubr.f32.gmra.mrb[0].mxu0 %v526
      %v621 = vpop.f32.mrb[0].mxu0
      %v622 = vadd.f32 0.0, %v621
      %v623 = vpop.f32.mrb[0].mxu0
      %624 = vmatprep.mubr.f32.mxu0 0.0
      %625 = vmatmul.mubr.f32.gmra.mrb[0].mxu0 %v529
      %v626 = vpop.f32.mrb[0].mxu0
      %v627 = vadd.f32 0.0, %v626
      %v628 = vpop.f32.mrb[0].mxu0
      %629 = vmatprep.mubr.f32.mxu0 0.0
      %630 = vmatmul.mubr.f32.gmra.mrb[0].mxu0 %v532
      %v631 = vpop.f32.mrb[0].mxu0
      %v632 = vadd.f32 0.0, %v631
      %v633 = vpop.f32.mrb[0].mxu0
      %634 = vmatprep.mubr.f32.mxu0 0.0
      %635 = vmatmul.mubr.f32.gmra.mrb[0].mxu0 %v535
      %v636 = vpop.f32.mrb[0].mxu0
      %v637 = vadd.f32 0.0, %v636
      %v638 = vpop.f32.mrb[0].mxu0
      %639 = vdwg.mxu0
      %v640 = vadd.f32 %v471, %v607
      %v641 = vadd.f32 %v476, %v612
      %v642 = vadd.f32 %v481, %v617
      %v643 = vadd.f32 %v486, %v622
      %v644 = vadd.f32 %v491, %v627
      %v645 = vadd.f32 %v496, %v632
      %v646 = vadd.f32 %v501, %v637
      %v647 = vld [vmem:[#allocation2] sm:$0xff]
      %v648 = vld [vmem:[#allocation2 + $0x8] sm:$0xff]
      %v649 = vld [vmem:[#allocation2 + $0x10] sm:$0xff]
      %v650 = vld [vmem:[#allocation2 + $0x18] sm:$0xff]
      %v651 = vld [vmem:[#allocation2 + $0x20] sm:$0xff]
      %v652 = vld [vmem:[#allocation2 + $0x28] sm:$0xff]
      %v653 = vld [vmem:[#allocation2 + $0x30] sm:$0xff]
      %v654 = vadd.f32 %v647, %v640
      %v655 = vadd.f32 %v648, %v641
      %v656 = vadd.f32 %v649, %v642
      %v657 = vadd.f32 %v650, %v643
      %v658 = vadd.f32 %v651, %v644
      %v659 = vadd.f32 %v652, %v645
      %v660 = vadd.f32 %v653, %v646
      %vm661 = vcmask 48128
      %662 = vst.msk [vmem:[#allocation2] sm:$0xff] %vm661, %v654
      %663 = vst.msk [vmem:[#allocation2 + $0x8] sm:$0xff] %vm661, %v655
      %664 = vst.msk [vmem:[#allocation2 + $0x10] sm:$0xff] %vm661, %v656
      %665 = vst.msk [vmem:[#allocation2 + $0x18] sm:$0xff] %vm661, %v657
      %666 = vst.msk [vmem:[#allocation2 + $0x20] sm:$0xff] %vm661, %v658
      %667 = vst.msk [vmem:[#allocation2 + $0x28] sm:$0xff] %vm661, %v659
      %668 = vst.msk [vmem:[#allocation2 + $0x30] sm:$0xff] %vm661, %v660
      %p669 = scmp.eq.s32.totalorder %s28, 1
      // Predicated region
      $region37: #{conv_transpose3d_pallas.2} parent=31 // pred_check
        %p670 = pneg %p669
      $region38: #{conv_transpose3d_pallas.2} parent=31 // pred_check_branch
        %672 = sbr.rel (%p670) target = $region40
      $region39: #{conv_transpose3d_pallas.2} parent=31 // pred_region
        %v673 = vld [vmem:[#allocation2] sm:$0xff]
        %v674 = vld [vmem:[#allocation2 + $0x8] sm:$0xff]
        %v675 = vld [vmem:[#allocation2 + $0x10] sm:$0xff]
        %v676 = vld [vmem:[#allocation2 + $0x18] sm:$0xff]
        %v677 = vld [vmem:[#allocation2 + $0x20] sm:$0xff]
        %v678 = vld [vmem:[#allocation2 + $0x28] sm:$0xff]
        %v679 = vld [vmem:[#allocation2 + $0x30] sm:$0xff]
        %680 = vst.msk [vmem:[%s234] sm:$0xff] %vm661, %v673
        %681 = vst.msk [vmem:[%s234 + $0x8] sm:$0xff] %vm661, %v674
        %682 = vst.msk [vmem:[%s234 + $0x10] sm:$0xff] %vm661, %v675
        %683 = vst.msk [vmem:[%s234 + $0x18] sm:$0xff] %vm661, %v676
        %684 = vst.msk [vmem:[%s234 + $0x20] sm:$0xff] %vm661, %v677
        %685 = vst.msk [vmem:[%s234 + $0x28] sm:$0xff] %vm661, %v678
        %686 = vst.msk [vmem:[%s234 + $0x30] sm:$0xff] %vm661, %v679
      $region40: #{conv_transpose3d_pallas.2} parent=31 // pred_fallthru
        _
      %p687 = scmp.lt.s32.totalorder %s26, 1
      %s688 = scalar_select %p687, %s26, 1
      %p689 = scmp.lt.s32.totalorder %s27, 5
      %s690 = scalar_select %p689, %s27, 5
      %s691 = smul.addr %s690, 7
      %s692 = smul.addr %s688, 42
      %s693 = sadd.s32 %s691, %s692
      %s694 = smul.addr %s693, 8
      %s695 = scalar_lea.vmem %s4, %s694
      // Predicated region
      $region41: #{conv_transpose3d_pallas.2} parent=31 // pred_check
        %p696 = pneg %p134
      $region42: #{conv_transpose3d_pallas.2} parent=31 // pred_check_branch
        %698 = sbr.rel (%p696) target = $region44
      $region43: #{conv_transpose3d_pallas.2} parent=31 // pred_region
        _
      $region44: #{conv_transpose3d_pallas.2} parent=31 // pred_fallthru
        _
    $region32: #{conv_transpose3d_pallas.2} parent=5 // pred_fallthru
      _
    %p699 = scmp.le.s32.totalorder 2, %s16
    // Predicated region
    $region45: #{conv_transpose3d_pallas.2} parent=5 // pred_check
      %p700 = pneg %p699
    $region46: #{conv_transpose3d_pallas.2} parent=5 // pred_check_branch
      %702 = sbr.rel (%p700) target = $region48
    $region47: #{conv_transpose3d_pallas.2} parent=5 // pred_region
      %s703 = ssub.s32 %s16, 2
      // Predicated region
      $region49: #{conv_transpose3d_pallas.2} parent=47 // pred_check
        %p704 = pneg %p140
      $region50: #{conv_transpose3d_pallas.2} parent=47 // pred_check_branch
        %706 = sbr.rel (%p704) target = $region52
      $region51: #{conv_transpose3d_pallas.2} parent=47 // pred_region
        %p707 = scmp.lt.s32.totalorder %s29, 1
        %s708 = scalar_select %p707, %s29, 1
        %p709 = scmp.lt.s32.totalorder %s30, 5
        %s710 = scalar_select %p709, %s30, 5
        %s711 = smul.addr %s710, 7
        %s712 = smul.addr %s708, 42
        %s713 = sadd.s32 %s711, %s712
        %s714 = smul.addr %s713, 8
        %s715 = scalar_lea.vmem %s4, %s714
      $region52: #{conv_transpose3d_pallas.2} parent=47 // pred_fallthru
        _
    $region48: #{conv_transpose3d_pallas.2} parent=5 // pred_fallthru
      _
  $region6: #{conv_transpose3d_pallas.2} parent=0 // loop_footer
    %s20 = sadd.s32 1, %s16
  $region7: #{conv_transpose3d_pallas.2} parent=0 // loop_footer_branch
    %15 = sbr.rel target = $region3
  $region8: #{conv_transpose3d_pallas.2} parent=0 // loop_exit
    _

// kernel: conv_transpose3d_pallas.3
$region0: #{conv_transpose3d_pallas.3}
  #allocation0 [shape = 'u32[]', space=smem, size = 0x4, offset = 0x4, fixed_abs, tag = 'smem constant byte address 0x4 - core index']
  #allocation1 [shape = 'u32[144,128]{1,0:T(1,128)}', space=vmem, size = 0x12000, scoped, tag = 'internal scratch']
  #allocation2 [shape = 'f32[1,56,6]{2,1,0:T(8,128)}', space=vmem, size = 0x7000, scoped, tag = 'scratch operand']
  #allocation3 [shape = 's32[1]{0}', space=sflag, size = 0x4, scoped, tag = 'scoped memory for conv_transpose3d_pallas.3']
  #allocation4 [shape = 's32[1]{0:T(128)S(6)}', space=smem, size = 0x200, scoped, tag = 'prefetched SMEM operand 0']
  %s0 = inlined_call_operand.<no memory space> [shape: s32[1], index: 0, kind: input, shape index: {}]
  %s1 = inlined_call_operand.vmem [shape: f32[2,7,72,12], index: 1, kind: input, shape index: {}]
  %s2 = inlined_call_operand.vmem [shape: f32[3,12,6], index: 2, kind: input, shape index: {}]
  %s3 = inlined_call_operand.vmem [shape: f32[1,6], index: 3, kind: input, shape index: {}]
  %s4 = inlined_call_operand.vmem [shape: f32[2,6,1,56,6], index: 4, kind: output, shape index: {}]
  %s5 = sld [smem:[#allocation0]]
  $region53: #{conv_transpose3d_pallas.3} parent=0
    _
  %s7 = ssub.s32 1, %s5
  %s8 = scalar_select 0, %s7, %s5
  %9 = sst [smem:[#allocation4]] %s0
  loop: start=0, step=1, limit=14
  $region2: #{conv_transpose3d_pallas.3} parent=0 // loop_pre_header
    _
  $region3: #{conv_transpose3d_pallas.3} parent=0 // loop_header
    %s11 = sphi 0, %s15
    %p12 = scmp.ge.s32.totalorder %s11, 14
    %s18 = sphi 0, %s37
    %s19 = sphi 0, %s33
    %s20 = sphi 0, %s29
    %s21 = sphi 0, %s18
    %s22 = sphi 0, %s19
    %s23 = sphi 0, %s20
    %s24 = sphi 0, %s21
    %s25 = sphi 0, %s22
    %s26 = sphi 0, %s23
    %s46 = sphi 0, %s48
    %s49 = sphi 0, %s46
    %s50 = sphi 0, %s49
    %s66 = sphi 0, %s50
    %s70 = sphi 0, %s70
    %s72 = sphi 0, %s70
    %s73 = sphi 0, %s72
    %s87 = sphi 0, %s73
    %s91 = sphi 0, %s91
    %s93 = sphi 0, %s91
    %s94 = sphi 0, %s93
    %s108 = sphi 0, %s94
    %s116 = sphi 0, %s118
    %s119 = sphi 0, %s116
    %s120 = sphi 0, %s119
    %s136 = sphi 0, %s120
  $region4: #{conv_transpose3d_pallas.3} parent=0 // loop_header_branch
    %14 = sbr.rel (%p12) target = $region8
  $region5: #{conv_transpose3d_pallas.3} parent=0 // loop_body
    %s16 = ssub.s32 %s11, 1
    %s17 = ssub.s32 %s11, 2
    %s27 = sadd.s32 1, %s20
    %p28 = scmp.ge.s32.totalorder %s27, 1
    %s29 = scalar_select %p28, 0, %s27
    %s30 = sadd.s32 1, %s19
    %s31 = scalar_select %p28, %s30, %s19
    %p32 = scmp.ge.s32.totalorder %s31, 6
    %s33 = scalar_select %p32, 0, %s31
    %s34 = sadd.s32 1, %s18
    %s35 = scalar_select %p32, %s34, %s18
    %p36 = scmp.ge.s32.totalorder %s35, 2
    %s37 = scalar_select %p36, 0, %s35
    %s38 = sld [smem:[#allocation4 + %s20]]
    %s39 = sadd.s32 %s19, %s38
    %s40 = sld [smem:[#allocation4 + %s29]]
    %s41 = sadd.s32 %s33, %s40
    %s42 = ssub.s32 %s18, %s37
    %s43 = ssub.s32 %s39, %s41
    %s44 = sor.u32 %s42, %s43
    %p45 = scmp.eq.s32.totalorder %s44, 0
    %s47 = sadd.s32 %s46, 1
    %s48 = scalar_select %p45, %s46, %s47
    %p51 = pneg %p45
    %p52 = scmp.eq.s32.totalorder %s11, 11
    %p53 = por %p51, %p52
    %p54 = scmp.ne.s32.totalorder %s46, %s49
    %p55 = scmp.eq.s32.totalorder %s11, 0
    %p56 = por %p54, %p55
    %p57 = scmp.ne.s32.totalorder %s46, %s49
    %p58 = scmp.eq.s32.totalorder %s16, 11
    %p59 = por %p57, %p58
    %p60 = scmp.ne.s32.totalorder %s49, %s50
    %p61 = scmp.eq.s32.totalorder %s16, 0
    %p62 = por %p60, %p61
    %p63 = scmp.ne.s32.totalorder %s49, %s50
    %p64 = scmp.eq.s32.totalorder %s17, 11
    %p65 = por %p63, %p64
    %p67 = scmp.ne.s32.totalorder %s50, %s66
    %p68 = scmp.eq.s32.totalorder %s17, 0
    %p69 = por %p67, %p68
    %s71 = sadd.s32 %s70, 1
    %p74 = scmp.eq.s32.totalorder %s11, 11
    %p75 = scmp.ne.s32.totalorder %s70, %s72
    %p76 = scmp.eq.s32.totalorder %s11, 0
    %p77 = por %p75, %p76
    %p78 = scmp.ne.s32.totalorder %s70, %s72
    %p79 = scmp.eq.s32.totalorder %s16, 11
    %p80 = por %p78, %p79
    %p81 = scmp.ne.s32.totalorder %s72, %s73
    %p82 = scmp.eq.s32.totalorder %s16, 0
    %p83 = por %p81, %p82
    %p84 = scmp.ne.s32.totalorder %s72, %s73
    %p85 = scmp.eq.s32.totalorder %s17, 11
    %p86 = por %p84, %p85
    %p88 = scmp.ne.s32.totalorder %s73, %s87
    %p89 = scmp.eq.s32.totalorder %s17, 0
    %p90 = por %p88, %p89
    %s92 = sadd.s32 %s91, 1
    %p95 = scmp.eq.s32.totalorder %s11, 11
    %p96 = scmp.ne.s32.totalorder %s91, %s93
    %p97 = scmp.eq.s32.totalorder %s11, 0
    %p98 = por %p96, %p97
    %p99 = scmp.ne.s32.totalorder %s91, %s93
    %p100 = scmp.eq.s32.totalorder %s16, 11
    %p101 = por %p99, %p100
    %p102 = scmp.ne.s32.totalorder %s93, %s94
    %p103 = scmp.eq.s32.totalorder %s16, 0
    %p104 = por %p102, %p103
    %p105 = scmp.ne.s32.totalorder %s93, %s94
    %p106 = scmp.eq.s32.totalorder %s17, 11
    %p107 = por %p105, %p106
    %p109 = scmp.ne.s32.totalorder %s94, %s108
    %p110 = scmp.eq.s32.totalorder %s17, 0
    %p111 = por %p109, %p110
    %s112 = ssub.s32 %s18, %s37
    %s113 = ssub.s32 %s19, %s33
    %s114 = sor.u32 %s112, %s113
    %p115 = scmp.eq.s32.totalorder %s114, 0
    %s117 = sadd.s32 %s116, 1
    %s118 = scalar_select %p115, %s116, %s117
    %p121 = pneg %p115
    %p122 = scmp.eq.s32.totalorder %s11, 11
    %p123 = por %p121, %p122
    %p124 = scmp.ne.s32.totalorder %s116, %s119
    %p125 = scmp.eq.s32.totalorder %s11, 0
    %p126 = por %p124, %p125
    %p127 = scmp.ne.s32.totalorder %s116, %s119
    %p128 = scmp.eq.s32.totalorder %s16, 11
    %p129 = por %p127, %p128
    %p130 = scmp.ne.s32.totalorder %s119, %s120
    %p131 = scmp.eq.s32.totalorder %s16, 0
    %p132 = por %p130, %p131
    %p133 = scmp.ne.s32.totalorder %s119, %s120
    %p134 = scmp.eq.s32.totalorder %s17, 11
    %p135 = por %p133, %p134
    %p137 = scmp.ne.s32.totalorder %s120, %s136
    %p138 = scmp.eq.s32.totalorder %s17, 0
    %p139 = por %p137, %p138
    %p140 = scmp.le.s32.totalorder 1, %s11
    %p141 = scmp.lt.s32.totalorder %s11, 13
    %p142 = pnand %p140, %p141
    %p143 = pneg %p142
    // Predicated region
    $region9: #{conv_transpose3d_pallas.3} parent=5 // pred_check
      _
    $region10: #{conv_transpose3d_pallas.3} parent=5 // pred_check_branch
      %145 = sbr.rel (%p142) target = $region12
    $region11: #{conv_transpose3d_pallas.3} parent=5 // pred_region
      %s146 = ssub.s32 %s11, 1
      // Predicated region
      $region13: #{conv_transpose3d_pallas.3} parent=11 // pred_check
        %p147 = pneg %p83
      $region14: #{conv_transpose3d_pallas.3} parent=11 // pred_check_branch
        %149 = sbr.rel (%p147) target = $region16
      $region15: #{conv_transpose3d_pallas.3} parent=11 // pred_region
        _
      $region16: #{conv_transpose3d_pallas.3} parent=11 // pred_fallthru
        _
      // Predicated region
      $region17: #{conv_transpose3d_pallas.3} parent=11 // pred_check
        %p150 = pneg %p104
      $region18: #{conv_transpose3d_pallas.3} parent=11 // pred_check_branch
        %152 = sbr.rel (%p150) target = $region20
      $region19: #{conv_transpose3d_pallas.3} parent=11 // pred_region
        _
      $region20: #{conv_transpose3d_pallas.3} parent=11 // pred_fallthru
        _
    $region12: #{conv_transpose3d_pallas.3} parent=5 // pred_fallthru
      _
    %p153 = scmp.lt.s32.totalorder %s11, 12
    // Predicated region
    $region21: #{conv_transpose3d_pallas.3} parent=5 // pred_check
      %p154 = pneg %p153
    $region22: #{conv_transpose3d_pallas.3} parent=5 // pred_check_branch
      %156 = sbr.rel (%p154) target = $region24
    $region23: #{conv_transpose3d_pallas.3} parent=5 // pred_region
      // Predicated region
      $region25: #{conv_transpose3d_pallas.3} parent=23 // pred_check
        %p157 = pneg %p56
      $region26: #{conv_transpose3d_pallas.3} parent=23 // pred_check_branch
        %159 = sbr.rel (%p157) target = $region28
      $region27: #{conv_transpose3d_pallas.3} parent=23 // pred_region
        %s160 = sld [smem:[#allocation4 + %s20]]
        %s161 = sadd.s32 %s19, %s160
        %p162 = scmp.lt.s32.totalorder %s18, 1
        %s163 = scalar_select %p162, %s18, 1
        %p164 = scmp.lt.s32.totalorder %s161, 6
        %s165 = scalar_select %p164, %s161, 6
        %s166 = smul.addr %s165, 9
        %s167 = smul.addr %s163, 63
        %s168 = sadd.s32 %s166, %s167
        %s169 = smul.addr %s168, 8
        %s170 = scalar_lea.vmem %s1, %s169
        %s171 = sld [smem:[#allocation4 + %s20]]
        %s172 = sadd.s32 %s19, %s171
      $region28: #{conv_transpose3d_pallas.3} parent=23 // pred_fallthru
        _
    $region24: #{conv_transpose3d_pallas.3} parent=5 // pred_fallthru
      _
    %p173 = scmp.le.s32.totalorder 1, %s11
    %p174 = scmp.lt.s32.totalorder %s11, 13
    %p175 = pnand %p173, %p174
    %p176 = pneg %p175
    // Predicated region
    $region29: #{conv_transpose3d_pallas.3} parent=5 // pred_check
      _
    $region30: #{conv_transpose3d_pallas.3} parent=5 // pred_check_branch
      %178 = sbr.rel (%p175) target = $region32
    $region31: #{conv_transpose3d_pallas.3} parent=5 // pred_region
      %s179 = ssub.s32 %s11, 1
      %s180 = sld [smem:[#allocation4 + %s23]]
      %s181 = sadd.s32 %s22, %s180
      %p182 = scmp.lt.s32.totalorder %s21, 1
      %s183 = scalar_select %p182, %s21, 1
      %p184 = scmp.lt.s32.totalorder %s181, 6
      %s185 = scalar_select %p184, %s181, 6
      %s186 = smul.addr %s185, 9
      %s187 = smul.addr %s183, 63
      %s188 = sadd.s32 %s186, %s187
      %s189 = smul.addr %s188, 8
      %s190 = scalar_lea.vmem %s1, %s189
      %p191 = pneg %p62
      %p192 = pneg %p59
      %p193 = pneg %p83
      %p194 = pneg %p80
      %p195 = pneg %p104
      %p196 = pneg %p101
      %p197 = pneg %p132
      %p198 = pneg %p129
      %p199 = scmp.lt.s32.totalorder %s21, 1
      %s200 = scalar_select %p199, %s21, 1
      %p201 = scmp.lt.s32.totalorder %s22, 5
      %s202 = scalar_select %p201, %s22, 5
      %s203 = smul.addr %s202, 7
      %s204 = smul.addr %s200, 42
      %s205 = sadd.s32 %s203, %s204
      %s206 = smul.addr %s205, 8
      %s207 = scalar_lea.vmem %s4, %s206
      %s208 = sld [smem:[#allocation4 + %s23]]
      %s209 = sadd.s32 %s22, %s208
      %p210 = scmp.lt.s32.totalorder %s21, 1
      %s211 = scalar_select %p210, %s21, 1
      %p212 = scmp.lt.s32.totalorder %s209, 6
      %s213 = scalar_select %p212, %s209, 6
      %s214 = smul.addr %s213, 9
      %s215 = smul.addr %s211, 63
      %s216 = sadd.s32 %s214, %s215
      %s217 = smul.addr %s216, 8
      %s218 = scalar_lea.vmem %s1, %s217
      %s219 = sld [smem:[#allocation4 + %s23]]
      %s220 = sadd.s32 %s22, %s219
      %p221 = scmp.lt.s32.totalorder %s21, 1
      %s222 = scalar_select %p221, %s21, 1
      %p223 = scmp.lt.s32.totalorder %s22, 5
      %s224 = scalar_select %p223, %s22, 5
      %s225 = smul.addr %s224, 7
      %s226 = smul.addr %s222, 42
      %s227 = sadd.s32 %s225, %s226
      %s228 = smul.addr %s227, 8
      %s229 = scalar_lea.vmem %s4, %s228
      %p230 = scmp.eq.s32.totalorder %s23, 0
      // Predicated region
      $region33: #{conv_transpose3d_pallas.3} parent=31 // pred_check
        %p231 = pneg %p230
      $region34: #{conv_transpose3d_pallas.3} parent=31 // pred_check_branch
        %233 = sbr.rel (%p231) target = $region36
      $region35: #{conv_transpose3d_pallas.3} parent=31 // pred_region
        %v234 = vld [vmem:[%s3] sm:$0x1]
        %v236 = vlaneseq
        %v237 = vshrl.u32 %v236, 7
        %v238 = vsub.s32 0, %v237
        %v239 = vrot.slane %v234, %v238
        %vm241 = vcmask 48128
        %242 = vst.msk [vmem:[#allocation2] sm:$0xff] %vm241, %v239
        %243 = vst.msk [vmem:[#allocation2 + $0x8] sm:$0xff] %vm241, %v239
        %244 = vst.msk [vmem:[#allocation2 + $0x10] sm:$0xff] %vm241, %v239
        %245 = vst.msk [vmem:[#allocation2 + $0x18] sm:$0xff] %vm241, %v239
        %246 = vst.msk [vmem:[#allocation2 + $0x20] sm:$0xff] %vm241, %v239
        %247 = vst.msk [vmem:[#allocation2 + $0x28] sm:$0xff] %vm241, %v239
        %248 = vst.msk [vmem:[#allocation2 + $0x30] sm:$0xff] %vm241, %v239
      $region36: #{conv_transpose3d_pallas.3} parent=31 // pred_fallthru
        _
      %s249 = smul.u32 %s23, 3
      %v250 = vld [vmem:[%s218 + $0x10] sm:$0xff]
      %v251 = vld [vmem:[%s218 + $0x18] sm:$0xff]
      %v252 = vld [vmem:[%s218 + $0x20] sm:$0xff]
      %v253 = vld [vmem:[%s218 + $0x28] sm:$0xff]
      %v254 = vld [vmem:[%s218 + $0x30] sm:$0xff]
      %v255 = vld [vmem:[%s218 + $0x38] sm:$0xff]
      %v256 = vld [vmem:[%s218 + $0x40] sm:$0xff]
      %s257 = smul.u32 %s249, 16
      %s258 = scalar_lea.vmem %s2, %s257
      %v259 = vld [vmem:[%s258] sm:$0xff]
      %v260 = vld [vmem:[%s258 + $0x8] sm:$0xf]
      %v261 = vld [vmem:[%s218 + $0x8] sm:$0xff]
      %s262 = sadd.s32 %s249, 1
      %s263 = smul.u32 %s262, 16
      %s264 = scalar_lea.vmem %s2, %s263
      %v265 = vld [vmem:[%s264] sm:$0xff]
      %v266 = vld [vmem:[%s264 + $0x8] sm:$0xf]
      %vm267 = vcmask 97280
      %v269 = vsel %vm267, %v261, 0
      %v272 = vsel %vm267, %v250, 0
      %v275 = vsel %vm267, %v251, 0
      %v278 = vsel %vm267, %v252, 0
      %v281 = vsel %vm267, %v253, 0
      %v284 = vsel %vm267, %v254, 0
      %v287 = vsel %vm267, %v255, 0
      %vm289 = vcmask 1043456
      %v291 = vsel %vm289, %v266, 0
      %293 = vmatprep.subr.mxu0 0.0
      %294 = vmatpush1.msra.mxu0 %v265
      %295 = vmatprep.subr.mxu0 0.0
      %296 = vmatpush1.msra.mxu0 %v291
      %297 = vmatprep.subr.mxu0 0.0
      %298 = vmatpush1.msra.mxu0 0.0
      %299 = vmatprep.subr.mxu0 0.0
      %300 = vmatpush1.msra.mxu0 0.0
      %301 = vmatprep.subr.mxu0 0.0
      %302 = vmatpush1.msra.mxu0 0.0
      %303 = vmatprep.subr.mxu0 0.0
      %304 = vmatpush1.msra.mxu0 0.0
      %305 = vmatprep.subr.mxu0 0.0
      %306 = vmatpush1.msra.mxu0 0.0
      %307 = vmatprep.subr.mxu0 0.0
      %308 = vmatpush1.msra.mxu0 0.0
      %309 = vmatprep.subr.mxu0 0.0
      %310 = vmatpush1.msra.mxu0 0.0
      %311 = vmatprep.subr.mxu0 0.0
      %312 = vmatpush1.msra.mxu0 0.0
      %313 = vmatprep.subr.mxu0 0.0
      %314 = vmatpush1.msra.mxu0 0.0
      %315 = vmatprep.subr.mxu0 0.0
      %316 = vmatpush1.msra.mxu0 0.0
      %317 = vmatprep.subr.mxu0 0.0
      %318 = vmatpush1.msra.mxu0 0.0
      %319 = vmatprep.subr.mxu0 0.0
      %320 = vmatpush1.msra.mxu0 0.0
      %321 = vmatprep.subr.mxu0 0.0
      %322 = vmatpush1.msra.mxu0 0.0
      %323 = vmatprep.subr.mxu0 0.0
      %324 = vmatpush1.msra.mxu0 0.0
      %325 = vmatprep.subr.mxu0 0.0
      %326 = vmatpush1.msra.mxu0 0.0
      %327 = vmatprep.subr.mxu0 0.0
      %328 = vmatpush1.msra.mxu0 0.0
      %329 = vmatprep.subr.mxu0 0.0
      %330 = vmatpush1.msra.mxu0 0.0
      %331 = vmatprep.subr.mxu0 0.0
      %332 = vmatpush1.msra.mxu0 0.0
      %333 = vmatprep.subr.mxu0 0.0
      %334 = vmatpush1.msra.mxu0 0.0
      %335 = vmatprep.subr.mxu0 0.0
      %336 = vmatpush1.msra.mxu0 0.0
      %337 = vmatprep.subr.mxu0 0.0
      %338 = vmatpush1.msra.mxu0 0.0
      %339 = vmatprep.subr.mxu0 0.0
      %340 = vmatpush1.msra.mxu0 0.0
      %341 = vmatprep.subr.mxu0 0.0
      %342 = vmatpush1.msra.mxu0 0.0
      %343 = vmatprep.subr.mxu0 0.0
      %344 = vmatpush1.msra.mxu0 0.0
      %345 = vmatprep.subr.mxu0 0.0
      %346 = vmatpush1.msra.mxu0 0.0
      %347 = vmatprep.subr.mxu0 0.0
      %348 = vmatpush1.msra.mxu0 0.0
      %349 = vmatprep.subr.mxu0 0.0
      %350 = vmatpush1.msra.mxu0 0.0
      %351 = vmatprep.subr.mxu0 0.0
      %352 = vmatpush1.msra.mxu0 0.0
      %353 = vmatprep.subr.mxu0 0.0
      %354 = vmatpush1.msra.mxu0 0.0
      %355 = vmatprep.subr.mxu0 0.0
      %356 = vmatpush1.msra.mxu0 0.0
      %357 = vmatprep.mubr.f32.mxu0 0.0
      %358 = vmatmul.mubr.f32.gmra.mrb[0].mxu0 %v269
      %v359 = vpop.f32.mrb[0].mxu0
      %v360 = vadd.f32 0.0, %v359
      %v361 = vpop.f32.mrb[0].mxu0
      %362 = vmatprep.mubr.f32.mxu0 0.0
      %363 = vmatmul.mubr.f32.gmra.mrb[0].mxu0 %v272
      %v364 = vpop.f32.mrb[0].mxu0
      %v365 = vadd.f32 0.0, %v364
      %v366 = vpop.f32.mrb[0].mxu0
      %367 = vmatprep.mubr.f32.mxu0 0.0
      %368 = vmatmul.mubr.f32.gmra.mrb[0].mxu0 %v275
      %v369 = vpop.f32.mrb[0].mxu0
      %v370 = vadd.f32 0.0, %v369
      %v371 = vpop.f32.mrb[0].mxu0
      %372 = vmatprep.mubr.f32.mxu0 0.0
      %373 = vmatmul.mubr.f32.gmra.mrb[0].mxu0 %v278
      %v374 = vpop.f32.mrb[0].mxu0
      %v375 = vadd.f32 0.0, %v374
      %v376 = vpop.f32.mrb[0].mxu0
      %377 = vmatprep.mubr.f32.mxu0 0.0
      %378 = vmatmul.mubr.f32.gmra.mrb[0].mxu0 %v281
      %v379 = vpop.f32.mrb[0].mxu0
      %v380 = vadd.f32 0.0, %v379
      %v381 = vpop.f32.mrb[0].mxu0
      %382 = vmatprep.mubr.f32.mxu0 0.0
      %383 = vmatmul.mubr.f32.gmra.mrb[0].mxu0 %v284
      %v384 = vpop.f32.mrb[0].mxu0
      %v385 = vadd.f32 0.0, %v384
      %v386 = vpop.f32.mrb[0].mxu0
      %387 = vmatprep.mubr.f32.mxu0 0.0
      %388 = vmatmul.mubr.f32.gmra.mrb[0].mxu0 %v287
      %v389 = vpop.f32.mrb[0].mxu0
      %v390 = vadd.f32 0.0, %v389
      %v391 = vpop.f32.mrb[0].mxu0
      %392 = vdwg.mxu0
      %v394 = vsel %vm267, %v256, 0
      %v397 = vsel %vm289, %v260, 0
      %399 = vmatprep.subr.mxu0 0.0
      %400 = vmatpush1.msra.mxu0 %v259
      %401 = vmatprep.subr.mxu0 0.0
      %402 = vmatpush1.msra.mxu0 %v397
      %403 = vmatprep.subr.mxu0 0.0
      %404 = vmatpush1.msra.mxu0 0.0
      %405 = vmatprep.subr.mxu0 0.0
      %406 = vmatpush1.msra.mxu0 0.0
      %407 = vmatprep.subr.mxu0 0.0
      %408 = vmatpush1.msra.mxu0 0.0
      %409 = vmatprep.subr.mxu0 0.0
      %410 = vmatpush1.msra.mxu0 0.0
      %411 = vmatprep.subr.mxu0 0.0
      %412 = vmatpush1.msra.mxu0 0.0
      %413 = vmatprep.subr.mxu0 0.0
      %414 = vmatpush1.msra.mxu0 0.0
      %415 = vmatprep.subr.mxu0 0.0
      %416 = vmatpush1.msra.mxu0 0.0
      %417 = vmatprep.subr.mxu0 0.0
      %418 = vmatpush1.msra.mxu0 0.0
      %419 = vmatprep.subr.mxu0 0.0
      %420 = vmatpush1.msra.mxu0 0.0
      %421 = vmatprep.subr.mxu0 0.0
      %422 = vmatpush1.msra.mxu0 0.0
      %423 = vmatprep.subr.mxu0 0.0
      %424 = vmatpush1.msra.mxu0 0.0
      %425 = vmatprep.subr.mxu0 0.0
      %426 = vmatpush1.msra.mxu0 0.0
      %427 = vmatprep.subr.mxu0 0.0
      %428 = vmatpush1.msra.mxu0 0.0
      %429 = vmatprep.subr.mxu0 0.0
      %430 = vmatpush1.msra.mxu0 0.0
      %431 = vmatprep.subr.mxu0 0.0
      %432 = vmatpush1.msra.mxu0 0.0
      %433 = vmatprep.subr.mxu0 0.0
      %434 = vmatpush1.msra.mxu0 0.0
      %435 = vmatprep.subr.mxu0 0.0
      %436 = vmatpush1.msra.mxu0 0.0
      %437 = vmatprep.subr.mxu0 0.0
      %438 = vmatpush1.msra.mxu0 0.0
      %439 = vmatprep.subr.mxu0 0.0
      %440 = vmatpush1.msra.mxu0 0.0
      %441 = vmatprep.subr.mxu0 0.0
      %442 = vmatpush1.msra.mxu0 0.0
      %443 = vmatprep.subr.mxu0 0.0
      %444 = vmatpush1.msra.mxu0 0.0
      %445 = vmatprep.subr.mxu0 0.0
      %446 = vmatpush1.msra.mxu0 0.0
      %447 = vmatprep.subr.mxu0 0.0
      %448 = vmatpush1.msra.mxu0 0.0
      %449 = vmatprep.subr.mxu0 0.0
      %450 = vmatpush1.msra.mxu0 0.0
      %451 = vmatprep.subr.mxu0 0.0
      %452 = vmatpush1.msra.mxu0 0.0
      %453 = vmatprep.subr.mxu0 0.0
      %454 = vmatpush1.msra.mxu0 0.0
      %455 = vmatprep.subr.mxu0 0.0
      %456 = vmatpush1.msra.mxu0 0.0
      %457 = vmatprep.subr.mxu0 0.0
      %458 = vmatpush1.msra.mxu0 0.0
      %459 = vmatprep.subr.mxu0 0.0
      %460 = vmatpush1.msra.mxu0 0.0
      %461 = vmatprep.subr.mxu0 0.0
      %462 = vmatpush1.msra.mxu0 0.0
      %463 = vmatprep.mubr.f32.mxu0 0.0
      %464 = vmatmul.mubr.f32.gmra.mrb[0].mxu0 %v272
      %v465 = vpop.f32.mrb[0].mxu0
      %v466 = vadd.f32 %v360, %v465
      %v467 = vpop.f32.mrb[0].mxu0
      %468 = vmatprep.mubr.f32.mxu0 0.0
      %469 = vmatmul.mubr.f32.gmra.mrb[0].mxu0 %v275
      %v470 = vpop.f32.mrb[0].mxu0
      %v471 = vadd.f32 %v365, %v470
      %v472 = vpop.f32.mrb[0].mxu0
      %473 = vmatprep.mubr.f32.mxu0 0.0
      %474 = vmatmul.mubr.f32.gmra.mrb[0].mxu0 %v278
      %v475 = vpop.f32.mrb[0].mxu0
      %v476 = vadd.f32 %v370, %v475
      %v477 = vpop.f32.mrb[0].mxu0
      %478 = vmatprep.mubr.f32.mxu0 0.0
      %479 = vmatmul.mubr.f32.gmra.mrb[0].mxu0 %v281
      %v480 = vpop.f32.mrb[0].mxu0
      %v481 = vadd.f32 %v375, %v480
      %v482 = vpop.f32.mrb[0].mxu0
      %483 = vmatprep.mubr.f32.mxu0 0.0
      %484 = vmatmul.mubr.f32.gmra.mrb[0].mxu0 %v284
      %v485 = vpop.f32.mrb[0].mxu0
      %v486 = vadd.f32 %v380, %v485
      %v487 = vpop.f32.mrb[0].mxu0
      %488 = vmatprep.mubr.f32.mxu0 0.0
      %489 = vmatmul.mubr.f32.gmra.mrb[0].mxu0 %v287
      %v490 = vpop.f32.mrb[0].mxu0
      %v491 = vadd.f32 %v385, %v490
      %v492 = vpop.f32.mrb[0].mxu0
      %493 = vmatprep.mubr.f32.mxu0 0.0
      %494 = vmatmul.mubr.f32.gmra.mrb[0].mxu0 %v394
      %v495 = vpop.f32.mrb[0].mxu0
      %v496 = vadd.f32 %v390, %v495
      %v497 = vpop.f32.mrb[0].mxu0
      %498 = vdwg.mxu0
      %v499 = vld [vmem:[%s218] sm:$0xff]
      %v500 = vld [vmem:[%s218 + $0x8] sm:$0xff]
      %v501 = vld [vmem:[%s218 + $0x10] sm:$0xff]
      %v502 = vld [vmem:[%s218 + $0x18] sm:$0xff]
      %v503 = vld [vmem:[%s218 + $0x20] sm:$0xff]
      %v504 = vld [vmem:[%s218 + $0x28] sm:$0xff]
      %v505 = vld [vmem:[%s218 + $0x30] sm:$0xff]
      %s506 = sadd.s32 %s249, 2
      %s507 = smul.u32 %s506, 16
      %s508 = scalar_lea.vmem %s2, %s507
      %v509 = vld [vmem:[%s508] sm:$0xff]
      %v510 = vld [vmem:[%s508 + $0x8] sm:$0xf]
      %v512 = vsel %vm267, %v499, 0
      %v515 = vsel %vm267, %v500, 0
      %v518 = vsel %vm267, %v501, 0
      %v521 = vsel %vm267, %v502, 0
      %v524 = vsel %vm267, %v503, 0
      %v527 = vsel %vm267, %v504, 0
      %v530 = vsel %vm267, %v505, 0
      %v533 = vsel %vm289, %v510, 0
      %535 = vmatprep.subr.mxu0 0.0
      %536 = vmatpush1.msra.mxu0 %v509
      %537 = vmatprep.subr.mxu0 0.0
      %538 = vmatpush1.msra.mxu0 %v533
      %539 = vmatprep.subr.mxu0 0.0
      %540 = vmatpush1.msra.mxu0 0.0
      %541 = vmatprep.subr.mxu0 0.0
      %542 = vmatpush1.msra.mxu0 0.0
      %543 = vmatprep.subr.mxu0 0.0
      %544 = vmatpush1.msra.mxu0 0.0
      %545 = vmatprep.subr.mxu0 0.0
      %546 = vmatpush1.msra.mxu0 0.0
      %547 = vmatprep.subr.mxu0 0.0
      %548 = vmatpush1.msra.mxu0 0.0
      %549 = vmatprep.subr.mxu0 0.0
      %550 = vmatpush1.msra.mxu0 0.0
      %551 = vmatprep.subr.mxu0 0.0
      %552 = vmatpush1.msra.mxu0 0.0
      %553 = vmatprep.subr.mxu0 0.0
      %554 = vmatpush1.msra.mxu0 0.0
      %555 = vmatprep.subr.mxu0 0.0
      %556 = vmatpush1.msra.mxu0 0.0
      %557 = vmatprep.subr.mxu0 0.0
      %558 = vmatpush1.msra.mxu0 0.0
      %559 = vmatprep.subr.mxu0 0.0
      %560 = vmatpush1.msra.mxu0 0.0
      %561 = vmatprep.subr.mxu0 0.0
      %562 = vmatpush1.msra.mxu0 0.0
      %563 = vmatprep.subr.mxu0 0.0
      %564 = vmatpush1.msra.mxu0 0.0
      %565 = vmatprep.subr.mxu0 0.0
      %566 = vmatpush1.msra.mxu0 0.0
      %567 = vmatprep.subr.mxu0 0.0
      %568 = vmatpush1.msra.mxu0 0.0
      %569 = vmatprep.subr.mxu0 0.0
      %570 = vmatpush1.msra.mxu0 0.0
      %571 = vmatprep.subr.mxu0 0.0
      %572 = vmatpush1.msra.mxu0 0.0
      %573 = vmatprep.subr.mxu0 0.0
      %574 = vmatpush1.msra.mxu0 0.0
      %575 = vmatprep.subr.mxu0 0.0
      %576 = vmatpush1.msra.mxu0 0.0
      %577 = vmatprep.subr.mxu0 0.0
      %578 = vmatpush1.msra.mxu0 0.0
      %579 = vmatprep.subr.mxu0 0.0
      %580 = vmatpush1.msra.mxu0 0.0
      %581 = vmatprep.subr.mxu0 0.0
      %582 = vmatpush1.msra.mxu0 0.0
      %583 = vmatprep.subr.mxu0 0.0
      %584 = vmatpush1.msra.mxu0 0.0
      %585 = vmatprep.subr.mxu0 0.0
      %586 = vmatpush1.msra.mxu0 0.0
      %587 = vmatprep.subr.mxu0 0.0
      %588 = vmatpush1.msra.mxu0 0.0
      %589 = vmatprep.subr.mxu0 0.0
      %590 = vmatpush1.msra.mxu0 0.0
      %591 = vmatprep.subr.mxu0 0.0
      %592 = vmatpush1.msra.mxu0 0.0
      %593 = vmatprep.subr.mxu0 0.0
      %594 = vmatpush1.msra.mxu0 0.0
      %595 = vmatprep.subr.mxu0 0.0
      %596 = vmatpush1.msra.mxu0 0.0
      %597 = vmatprep.subr.mxu0 0.0
      %598 = vmatpush1.msra.mxu0 0.0
      %599 = vmatprep.mubr.f32.mxu0 0.0
      %600 = vmatmul.mubr.f32.gmra.mrb[0].mxu0 %v512
      %v601 = vpop.f32.mrb[0].mxu0
      %v602 = vadd.f32 0.0, %v601
      %v603 = vpop.f32.mrb[0].mxu0
      %604 = vmatprep.mubr.f32.mxu0 0.0
      %605 = vmatmul.mubr.f32.gmra.mrb[0].mxu0 %v515
      %v606 = vpop.f32.mrb[0].mxu0
      %v607 = vadd.f32 0.0, %v606
      %v608 = vpop.f32.mrb[0].mxu0
      %609 = vmatprep.mubr.f32.mxu0 0.0
      %610 = vmatmul.mubr.f32.gmra.mrb[0].mxu0 %v518
      %v611 = vpop.f32.mrb[0].mxu0
      %v612 = vadd.f32 0.0, %v611
      %v613 = vpop.f32.mrb[0].mxu0
      %614 = vmatprep.mubr.f32.mxu0 0.0
      %615 = vmatmul.mubr.f32.gmra.mrb[0].mxu0 %v521
      %v616 = vpop.f32.mrb[0].mxu0
      %v617 = vadd.f32 0.0, %v616
      %v618 = vpop.f32.mrb[0].mxu0
      %619 = vmatprep.mubr.f32.mxu0 0.0
      %620 = vmatmul.mubr.f32.gmra.mrb[0].mxu0 %v524
      %v621 = vpop.f32.mrb[0].mxu0
      %v622 = vadd.f32 0.0, %v621
      %v623 = vpop.f32.mrb[0].mxu0
      %624 = vmatprep.mubr.f32.mxu0 0.0
      %625 = vmatmul.mubr.f32.gmra.mrb[0].mxu0 %v527
      %v626 = vpop.f32.mrb[0].mxu0
      %v627 = vadd.f32 0.0, %v626
      %v628 = vpop.f32.mrb[0].mxu0
      %629 = vmatprep.mubr.f32.mxu0 0.0
      %630 = vmatmul.mubr.f32.gmra.mrb[0].mxu0 %v530
      %v631 = vpop.f32.mrb[0].mxu0
      %v632 = vadd.f32 0.0, %v631
      %v633 = vpop.f32.mrb[0].mxu0
      %634 = vdwg.mxu0
      %v635 = vadd.f32 %v466, %v602
      %v636 = vadd.f32 %v471, %v607
      %v637 = vadd.f32 %v476, %v612
      %v638 = vadd.f32 %v481, %v617
      %v639 = vadd.f32 %v486, %v622
      %v640 = vadd.f32 %v491, %v627
      %v641 = vadd.f32 %v496, %v632
      %v642 = vld [vmem:[#allocation2] sm:$0xff]
      %v643 = vld [vmem:[#allocation2 + $0x8] sm:$0xff]
      %v644 = vld [vmem:[#allocation2 + $0x10] sm:$0xff]
      %v645 = vld [vmem:[#allocation2 + $0x18] sm:$0xff]
      %v646 = vld [vmem:[#allocation2 + $0x20] sm:$0xff]
      %v647 = vld [vmem:[#allocation2 + $0x28] sm:$0xff]
      %v648 = vld [vmem:[#allocation2 + $0x30] sm:$0xff]
      %v649 = vadd.f32 %v642, %v635
      %v650 = vadd.f32 %v643, %v636
      %v651 = vadd.f32 %v644, %v637
      %v652 = vadd.f32 %v645, %v638
      %v653 = vadd.f32 %v646, %v639
      %v654 = vadd.f32 %v647, %v640
      %v655 = vadd.f32 %v648, %v641
      %vm656 = vcmask 48128
      %657 = vst.msk [vmem:[#allocation2] sm:$0xff] %vm656, %v649
      %658 = vst.msk [vmem:[#allocation2 + $0x8] sm:$0xff] %vm656, %v650
      %659 = vst.msk [vmem:[#allocation2 + $0x10] sm:$0xff] %vm656, %v651
      %660 = vst.msk [vmem:[#allocation2 + $0x18] sm:$0xff] %vm656, %v652
      %661 = vst.msk [vmem:[#allocation2 + $0x20] sm:$0xff] %vm656, %v653
      %662 = vst.msk [vmem:[#allocation2 + $0x28] sm:$0xff] %vm656, %v654
      %663 = vst.msk [vmem:[#allocation2 + $0x30] sm:$0xff] %vm656, %v655
      // Predicated region
      $region37: #{conv_transpose3d_pallas.3} parent=31 // pred_check
        %p664 = pneg %p230
      $region38: #{conv_transpose3d_pallas.3} parent=31 // pred_check_branch
        %666 = sbr.rel (%p664) target = $region40
      $region39: #{conv_transpose3d_pallas.3} parent=31 // pred_region
        %v667 = vld [vmem:[#allocation2] sm:$0xff]
        %v668 = vld [vmem:[#allocation2 + $0x8] sm:$0xff]
        %v669 = vld [vmem:[#allocation2 + $0x10] sm:$0xff]
        %v670 = vld [vmem:[#allocation2 + $0x18] sm:$0xff]
        %v671 = vld [vmem:[#allocation2 + $0x20] sm:$0xff]
        %v672 = vld [vmem:[#allocation2 + $0x28] sm:$0xff]
        %v673 = vld [vmem:[#allocation2 + $0x30] sm:$0xff]
        %674 = vst.msk [vmem:[%s229] sm:$0xff] %vm656, %v667
        %675 = vst.msk [vmem:[%s229 + $0x8] sm:$0xff] %vm656, %v668
        %676 = vst.msk [vmem:[%s229 + $0x10] sm:$0xff] %vm656, %v669
        %677 = vst.msk [vmem:[%s229 + $0x18] sm:$0xff] %vm656, %v670
        %678 = vst.msk [vmem:[%s229 + $0x20] sm:$0xff] %vm656, %v671
        %679 = vst.msk [vmem:[%s229 + $0x28] sm:$0xff] %vm656, %v672
        %680 = vst.msk [vmem:[%s229 + $0x30] sm:$0xff] %vm656, %v673
      $region40: #{conv_transpose3d_pallas.3} parent=31 // pred_fallthru
        _
      %p681 = scmp.lt.s32.totalorder %s21, 1
      %s682 = scalar_select %p681, %s21, 1
      %p683 = scmp.lt.s32.totalorder %s22, 5
      %s684 = scalar_select %p683, %s22, 5
      %s685 = smul.addr %s684, 7
      %s686 = smul.addr %s682, 42
      %s687 = sadd.s32 %s685, %s686
      %s688 = smul.addr %s687, 8
      %s689 = scalar_lea.vmem %s4, %s688
      // Predicated region
      $region41: #{conv_transpose3d_pallas.3} parent=31 // pred_check
        %p690 = pneg %p129
      $region42: #{conv_transpose3d_pallas.3} parent=31 // pred_check_branch
        %692 = sbr.rel (%p690) target = $region44
      $region43: #{conv_transpose3d_pallas.3} parent=31 // pred_region
        _
      $region44: #{conv_transpose3d_pallas.3} parent=31 // pred_fallthru
        _
    $region32: #{conv_transpose3d_pallas.3} parent=5 // pred_fallthru
      _
    %p693 = scmp.le.s32.totalorder 2, %s11
    // Predicated region
    $region45: #{conv_transpose3d_pallas.3} parent=5 // pred_check
      %p694 = pneg %p693
    $region46: #{conv_transpose3d_pallas.3} parent=5 // pred_check_branch
      %696 = sbr.rel (%p694) target = $region48
    $region47: #{conv_transpose3d_pallas.3} parent=5 // pred_region
      %s697 = ssub.s32 %s11, 2
      // Predicated region
      $region49: #{conv_transpose3d_pallas.3} parent=47 // pred_check
        %p698 = pneg %p135
      $region50: #{conv_transpose3d_pallas.3} parent=47 // pred_check_branch
        %700 = sbr.rel (%p698) target = $region52
      $region51: #{conv_transpose3d_pallas.3} parent=47 // pred_region
        %p701 = scmp.lt.s32.totalorder %s24, 1
        %s702 = scalar_select %p701, %s24, 1
        %p703 = scmp.lt.s32.totalorder %s25, 5
        %s704 = scalar_select %p703, %s25, 5
        %s705 = smul.addr %s704, 7
        %s706 = smul.addr %s702, 42
        %s707 = sadd.s32 %s705, %s706
        %s708 = smul.addr %s707, 8
        %s709 = scalar_lea.vmem %s4, %s708
      $region52: #{conv_transpose3d_pallas.3} parent=47 // pred_fallthru
        _
    $region48: #{conv_transpose3d_pallas.3} parent=5 // pred_fallthru
      _
  $region6: #{conv_transpose3d_pallas.3} parent=0 // loop_footer
    %s15 = sadd.s32 1, %s11
  $region7: #{conv_transpose3d_pallas.3} parent=0 // loop_footer_branch
    %10 = sbr.rel target = $region3
  $region8: #{conv_transpose3d_pallas.3} parent=0 // loop_exit
    _

</llo_original>
